<compile_context>
chip_gen: v5e
topology: v5e:2x2
jax: 0.10.0
libtpu: 0.0.40
codegen_flags: <defaults>
</compile_context>

<pallas_src>
import functools

import jax
import jax.numpy as jnp
from jax.experimental import pallas as pl
from jax.experimental.pallas import tpu as pltpu


# --------------------------------- kernel ------------------------------------

def _make_decoder_kernel(num_layers, compute_dtype):
    """Kernel over one batch tile: z_tile -> MLP (ReLU between, Sigmoid last)."""

    def kernel(*refs):
        z_ref = refs[0]
        w_refs = refs[1:1 + num_layers]                  # (fan_in, fan_out), compute_dtype
        b_refs = refs[1 + num_layers:1 + 2 * num_layers] # (1, fan_out), f32
        x_ref = refs[1 + 2 * num_layers]

        h = z_ref[...].astype(compute_dtype)
        for li in range(num_layers):
            w = w_refs[li][...]
            b = b_refs[li][...]
            # bf16 (or f32) operands, f32 accumulation on the MXU.
            y = jnp.dot(h, w, preferred_element_type=jnp.float32) + b
            if li + 1 < num_layers:
                h = jnp.maximum(y, 0.0).astype(compute_dtype)      # ReLU
            else:
                h = 0.5 * (jnp.tanh(0.5 * y) + 1.0)                # Sigmoid via tanh
        x_ref[...] = h.astype(x_ref.dtype)

    return kernel


# --------------------------------- wrapper -----------------------------------

@functools.partial(jax.jit, static_argnames=("tb", "compute_dtype", "out_dtype"))
def decoder_forward(z, c, ws, bs, *, tb,
                    compute_dtype=jnp.bfloat16, out_dtype=jnp.bfloat16):
    """Decoder.forward(z, c).  `c` is unused, matching the PyTorch module."""
    del c  # Decoder.forward never consumes c (input_size == latent_size either way)

    B, L = z.shape
    assert B % tb == 0, "batch must be a multiple of the batch tile"
    num_layers = len(ws)
    out_dim = ws[-1].shape[1]

    # Weights travel / reside in compute precision (halves DMA + VMEM for bf16);
    # biases stay f32 since they add into the f32 accumulator.
    ws = [w.astype(compute_dtype) for w in ws]
    bs = [b.astype(jnp.float32) for b in bs]

    in_specs = [pl.BlockSpec((tb, L), lambda i: (i, 0))]          # batch-tiled input
    for w in ws:                                                  # resident weights
        in_specs.append(pl.BlockSpec(w.shape, lambda i: (0, 0)))
    for b in bs:                                                  # resident biases
        in_specs.append(pl.BlockSpec(b.shape, lambda i: (0, 0)))
    out_spec = pl.BlockSpec((tb, out_dim), lambda i: (i, 0))      # lane-dense output

    return pl.pallas_call(
        _make_decoder_kernel(num_layers, compute_dtype),
        out_shape=jax.ShapeDtypeStruct((B, out_dim), out_dtype),
        grid=(B // tb,),
        in_specs=in_specs,
        out_specs=out_spec,
        compiler_params=pltpu.CompilerParams(
            dimension_semantics=("parallel",)),                   # megacore sharding
    )(z, *ws, *bs)


def pick_batch_tile(B):
    """grid=(1,) on single-TC chips; 2 parallel tiles on dual-TC v7x."""
    try:
        kind = jax.devices()[0].device_kind.lower()
    except Exception:
        kind = ""
    n_tiles = 2 if "v7" in kind else 1
    if B % n_tiles != 0:
        n_tiles = 1
    tb = B // n_tiles
    if tb != B and tb % 8 != 0:       # sublane alignment unless full extent
        tb = B
    return tb


# --------------------------- deterministic init -------------------------------

def init_params(key, latent_size, layer_sizes):
    """torch.nn.Linear-style init U(-1/sqrt(fan_in), 1/sqrt(fan_in)).

    Returns (ws, bs): W stored as (in_features, out_features) so y = x @ W + b
    (== torch Linear with W.T), b stored as (1, out_features).
    """
    ws, bs = [], []
    fan_in = latent_size
    for fan_out in layer_sizes:
        key, kw, kb = jax.random.split(key, 3)
        bound = 1.0 / jnp.sqrt(jnp.float32(fan_in))
        ws.append(jax.random.uniform(kw, (fan_in, fan_out), jnp.float32, -bound, bound))
        bs.append(jax.random.uniform(kb, (1, fan_out), jnp.float32, -bound, bound))
        fan_in = fan_out
    return ws, bs


# ------------------------------ pure-JAX reference ----------------------------

def decoder_ref(z, ws, bs):
    h = z
    for li, (w, b) in enumerate(zip(ws, bs)):
        y = h @ w + b
        h = jnp.maximum(y, 0.0) if li + 1 < len(ws) else jax.nn.sigmoid(y)
    return h


# ----------------------------------- main -------------------------------------

if __name__ == "__main__":
    B = 512                    # batch
    LATENT = 16                # latent_size
    LAYER_SIZES = [128, 256]   # layer_sizes: hidden (ReLU) -> output (Sigmoid)

    key = jax.random.PRNGKey(0)
    kz, kc, kp = jax.random.split(key, 3)
    z = jax.random.normal(kz, (B, LATENT), dtype=jnp.float32)
    c = jax.random.randint(kc, (B,), 0, 2)          # ignored by Decoder.forward
    ws, bs = init_params(kp, LATENT, LAYER_SIZES)

    tb = pick_batch_tile(B)                         # 512 on v5e/v6e, 256 on v7x
    ref = decoder_ref(z, ws, bs)

    # f32 parity build (tight tolerance against the pure-JAX reference).
    out_f32 = decoder_forward(z, c, ws, bs, tb=tb,
                              compute_dtype=jnp.float32, out_dtype=jnp.float32)
    out_f32 = jax.block_until_ready(out_f32)
    assert out_f32.shape == ref.shape, (out_f32.shape, ref.shape)
    assert bool(jnp.all(jnp.isfinite(out_f32)))
    assert jnp.allclose(out_f32, ref, atol=1e-4, rtol=1e-4), \
        float(jnp.max(jnp.abs(out_f32 - ref)))

    # bf16 serving build (bf16 MXU operands, f32 accumulation, bf16 writeback).
    out_bf16 = decoder_forward(z, c, ws, bs, tb=tb)  # defaults: bf16 compute + out
    out_bf16 = jax.block_until_ready(out_bf16)
    out_bf16_f32 = out_bf16.astype(jnp.float32)
    assert out_bf16.dtype == jnp.bfloat16
    assert bool(jnp.all(jnp.isfinite(out_bf16_f32)))
    assert jnp.allclose(out_bf16_f32, ref, atol=3e-2), \
        float(jnp.max(jnp.abs(out_bf16_f32 - ref)))

    print("KERNEL_OK")
</pallas_src>

<mosaic_0001>
module attributes {stable_mosaic.version = 11 : i64} {
  func.func @kernel(%arg0: i32, %arg1: memref<512x16xf32, #tpu.memory_space<vmem>>, %arg2: memref<16x128xf32, #tpu.memory_space<vmem>>, %arg3: memref<128x256xf32, #tpu.memory_space<vmem>>, %arg4: memref<1x128xf32, #tpu.memory_space<vmem>>, %arg5: memref<1x256xf32, #tpu.memory_space<vmem>>, %arg6: memref<512x256xf32, #tpu.memory_space<vmem>>) attributes {dimension_semantics = [#tpu.dimension_semantics<parallel>], iteration_bounds = array<i64: 1>, scalar_prefetch = 0 : i64, scratch_operands = 0 : i64, tpu.core_type = #tpu.core_type<tc>, window_params = [{transform_indices = @transform_0, window_bounds = array<i64: 512, 16>}, {pipeline_mode = #tpu.pipeline_mode<synchronous>, transform_indices = @transform_1, window_bounds = array<i64: 16, 128>}, {pipeline_mode = #tpu.pipeline_mode<synchronous>, transform_indices = @transform_2, window_bounds = array<i64: 128, 256>}, {pipeline_mode = #tpu.pipeline_mode<synchronous>, transform_indices = @transform_3, window_bounds = array<i64: 1, 128>}, {pipeline_mode = #tpu.pipeline_mode<synchronous>, transform_indices = @transform_4, window_bounds = array<i64: 1, 256>}, {transform_indices = @transform_5, window_bounds = array<i64: 512, 256>}]} {
    %c0 = arith.constant 0 : index
    %c0_0 = arith.constant 0 : index
    %0 = vector.load %arg1[%c0, %c0_0] : memref<512x16xf32, #tpu.memory_space<vmem>>, vector<512x16xf32>
    %c0_1 = arith.constant 0 : index
    %c0_2 = arith.constant 0 : index
    %1 = vector.load %arg2[%c0_1, %c0_2] : memref<16x128xf32, #tpu.memory_space<vmem>>, vector<16x128xf32>
    %c0_3 = arith.constant 0 : index
    %c0_4 = arith.constant 0 : index
    %2 = vector.load %arg4[%c0_3, %c0_4] : memref<1x128xf32, #tpu.memory_space<vmem>>, vector<1x128xf32>
    %cst = arith.constant dense<0.000000e+00> : vector<512x128xf32>
    %3 = tpu.matmul %0, %1, %cst {dimension_numbers = #tpu.dot_dimension_numbers<[1], [0], [0], [1], [0, 0, 1, 1], [], []>} : vector<512x16xf32>, vector<16x128xf32>, vector<512x128xf32> -> vector<512x128xf32>
    %4 = vector.broadcast %2 : vector<1x128xf32> to vector<512x128xf32>
    %5 = arith.addf %3, %4 : vector<512x128xf32>
    %cst_5 = arith.constant 0.000000e+00 : f32
    %6 = vector.broadcast %cst_5 : f32 to vector<512x128xf32>
    %7 = arith.maximumf %5, %6 : vector<512x128xf32>
    %c0_6 = arith.constant 0 : index
    %c0_7 = arith.constant 0 : index
    %8 = vector.load %arg3[%c0_6, %c0_7] : memref<128x256xf32, #tpu.memory_space<vmem>>, vector<128x256xf32>
    %c0_8 = arith.constant 0 : index
    %c0_9 = arith.constant 0 : index
    %9 = vector.load %arg5[%c0_8, %c0_9] : memref<1x256xf32, #tpu.memory_space<vmem>>, vector<1x256xf32>
    %cst_10 = arith.constant dense<0.000000e+00> : vector<512x256xf32>
    %10 = tpu.matmul %7, %8, %cst_10 {dimension_numbers = #tpu.dot_dimension_numbers<[1], [0], [0], [1], [0, 0, 1, 1], [], []>} : vector<512x128xf32>, vector<128x256xf32>, vector<512x256xf32> -> vector<512x256xf32>
    %11 = vector.broadcast %9 : vector<1x256xf32> to vector<512x256xf32>
    %12 = arith.addf %10, %11 : vector<512x256xf32>
    %cst_11 = arith.constant 5.000000e-01 : f32
    %13 = vector.broadcast %cst_11 : f32 to vector<512x256xf32>
    %14 = arith.mulf %13, %12 : vector<512x256xf32>
    %15 = math.tanh %14 : vector<512x256xf32>
    %cst_12 = arith.constant 1.000000e+00 : f32
    %16 = vector.broadcast %cst_12 : f32 to vector<512x256xf32>
    %17 = arith.addf %15, %16 : vector<512x256xf32>
    %cst_13 = arith.constant 5.000000e-01 : f32
    %18 = vector.broadcast %cst_13 : f32 to vector<512x256xf32>
    %19 = arith.mulf %18, %17 : vector<512x256xf32>
    %c0_14 = arith.constant 0 : index
    %c0_15 = arith.constant 0 : index
    %20 = vector.load %arg6[%c0_14, %c0_15] : memref<512x256xf32, #tpu.memory_space<vmem>>, vector<512x256xf32>
    tpu.vector_store %arg6[%c0_14, %c0_15], %19 {strides = array<i32>} : memref<512x256xf32, #tpu.memory_space<vmem>>, vector<512x256xf32>,
    return
  }
  func.func @transform_0(%arg0: i32) -> (i32, i32) {
    %c0_i32 = arith.constant 0 : i32
    %c0_i32_0 = arith.constant 0 : i32
    return %arg0, %c0_i32 : i32, i32
  }
  func.func @transform_1(%arg0: i32) -> (i32, i32) {
    %c0_i32 = arith.constant 0 : i32
    %c0_i32_0 = arith.constant 0 : i32
    %c0_i32_1 = arith.constant 0 : i32
    return %c0_i32, %c0_i32_0 : i32, i32
  }
  func.func @transform_2(%arg0: i32) -> (i32, i32) {
    %c0_i32 = arith.constant 0 : i32
    %c0_i32_0 = arith.constant 0 : i32
    %c0_i32_1 = arith.constant 0 : i32
    return %c0_i32, %c0_i32_0 : i32, i32
  }
  func.func @transform_3(%arg0: i32) -> (i32, i32) {
    %c0_i32 = arith.constant 0 : i32
    %c0_i32_0 = arith.constant 0 : i32
    %c0_i32_1 = arith.constant 0 : i32
    return %c0_i32, %c0_i32_0 : i32, i32
  }
  func.func @transform_4(%arg0: i32) -> (i32, i32) {
    %c0_i32 = arith.constant 0 : i32
    %c0_i32_0 = arith.constant 0 : i32
    %c0_i32_1 = arith.constant 0 : i32
    return %c0_i32, %c0_i32_0 : i32, i32
  }
  func.func @transform_5(%arg0: i32) -> (i32, i32) {
    %c0_i32 = arith.constant 0 : i32
    %c0_i32_0 = arith.constant 0 : i32
    return %arg0, %c0_i32 : i32, i32
  }
}

</mosaic_0001>

<llo_original>
// kernel: decoder_forward.1
$region0: #{decoder_forward.1}
  #allocation0 [shape = 'u32[]', space=smem, size = 0x4, offset = 0x4, fixed_abs, tag = 'smem constant byte address 0x4 - core index']
  #allocation1 [shape = 'u32[72,128]{1,0:T(1,128)}', space=vmem, size = 0x9000, scoped, tag = 'internal scratch']
  %s0 = inlined_call_operand.vmem [shape: f32[512,16], index: 0, kind: input, shape index: {}]
  %s1 = inlined_call_operand.vmem [shape: f32[16,128], index: 1, kind: input, shape index: {}]
  %s2 = inlined_call_operand.vmem [shape: f32[128,256], index: 2, kind: input, shape index: {}]
  %s3 = inlined_call_operand.vmem [shape: f32[1,128], index: 3, kind: input, shape index: {}]
  %s4 = inlined_call_operand.vmem [shape: f32[1,256], index: 4, kind: input, shape index: {}]
  %s5 = inlined_call_operand.hbm [shape: f32[512,256], index: 5, kind: output, shape index: {}]
  %s6 = sld [smem:[#allocation0]]
  $region30: #{decoder_forward.1} parent=0
    _
  %s8 = ssub.s32 1, %s6
  %s9 = scalar_select 0, %s8, %s6
  $region1: #{decoder_forward.1} parent=0
    #allocation2 [shape = 'u8[524288]{0}', space=vmem, size = 0x80000, scoped, tag = 'output window, operand 0, single buffered']
    #allocation3 [shape = 's32[1]{0}', space=sflag, size = 0x4, scoped, tag = 'scoped memory for decoder_forward.1']
    %10 = vsyncpa [#allocation3], 0
    // Predicated region
    $region2: #{decoder_forward.1} parent=1 // pred_check
      _
    $region3: #{decoder_forward.1} parent=1 // pred_check_branch
      %12 = sbr.rel (0) target = $region5
    $region4: #{decoder_forward.1} parent=1 // pred_region
      _
    $region5: #{decoder_forward.1} parent=1 // pred_fallthru
      _
    // Predicated region
    $region6: #{decoder_forward.1} parent=1 // pred_check
      _
    $region7: #{decoder_forward.1} parent=1 // pred_check_branch
      %14 = sbr.rel (0) target = $region9
    $region8: #{decoder_forward.1} parent=1 // pred_region
      _
    $region9: #{decoder_forward.1} parent=1 // pred_fallthru
      _
    // Predicated region
    $region10: #{decoder_forward.1} parent=1 // pred_check
      _
    $region11: #{decoder_forward.1} parent=1 // pred_check_branch
      %16 = sbr.rel (0) target = $region13
    $region12: #{decoder_forward.1} parent=1 // pred_region
      _
    $region13: #{decoder_forward.1} parent=1 // pred_fallthru
      _
    // Predicated region
    $region14: #{decoder_forward.1} parent=1 // pred_check
      _
    $region15: #{decoder_forward.1} parent=1 // pred_check_branch
      %18 = sbr.rel (0) target = $region17
    $region16: #{decoder_forward.1} parent=1 // pred_region
      _
    $region17: #{decoder_forward.1} parent=1 // pred_fallthru
      _
    // Predicated region
    $region18: #{decoder_forward.1} parent=1 // pred_check
      _
    $region19: #{decoder_forward.1} parent=1 // pred_check_branch
      %20 = sbr.rel (0) target = $region21
    $region20: #{decoder_forward.1} parent=1 // pred_region
      _
    $region21: #{decoder_forward.1} parent=1 // pred_fallthru
      _
    %v21 = vld [vmem:[%s0] sm:$0xff]
    %v22 = vld [vmem:[%s0 + $0x8] sm:$0xff]
    %v23 = vld [vmem:[%s0 + $0x10] sm:$0xff]
    %v24 = vld [vmem:[%s0 + $0x18] sm:$0xff]
    %v25 = vld [vmem:[%s0 + $0x20] sm:$0xff]
    %v26 = vld [vmem:[%s0 + $0x28] sm:$0xff]
    %v27 = vld [vmem:[%s0 + $0x30] sm:$0xff]
    %v28 = vld [vmem:[%s0 + $0x38] sm:$0xff]
    %v29 = vld [vmem:[%s0 + $0x40] sm:$0xff]
    %v30 = vld [vmem:[%s0 + $0x48] sm:$0xff]
    %v31 = vld [vmem:[%s0 + $0x50] sm:$0xff]
    %v32 = vld [vmem:[%s0 + $0x58] sm:$0xff]
    %v33 = vld [vmem:[%s0 + $0x60] sm:$0xff]
    %v34 = vld [vmem:[%s0 + $0x68] sm:$0xff]
    %v35 = vld [vmem:[%s0 + $0x70] sm:$0xff]
    %v36 = vld [vmem:[%s0 + $0x78] sm:$0xff]
    %v37 = vld [vmem:[%s0 + $0x80] sm:$0xff]
    %v38 = vld [vmem:[%s0 + $0x88] sm:$0xff]
    %v39 = vld [vmem:[%s0 + $0x90] sm:$0xff]
    %v40 = vld [vmem:[%s0 + $0x98] sm:$0xff]
    %v41 = vld [vmem:[%s0 + $0xa0] sm:$0xff]
    %v42 = vld [vmem:[%s0 + $0xa8] sm:$0xff]
    %v43 = vld [vmem:[%s0 + $0xb0] sm:$0xff]
    %v44 = vld [vmem:[%s0 + $0xb8] sm:$0xff]
    %v45 = vld [vmem:[%s0 + $0xc0] sm:$0xff]
    %v46 = vld [vmem:[%s0 + $0xc8] sm:$0xff]
    %v47 = vld [vmem:[%s0 + $0xd0] sm:$0xff]
    %v48 = vld [vmem:[%s0 + $0xd8] sm:$0xff]
    %v49 = vld [vmem:[%s0 + $0xe0] sm:$0xff]
    %v50 = vld [vmem:[%s0 + $0xe8] sm:$0xff]
    %v51 = vld [vmem:[%s0 + $0xf0] sm:$0xff]
    %v52 = vld [vmem:[%s0 + $0xf8] sm:$0xff]
    %v53 = vld [vmem:[%s0 + $0x100] sm:$0xff]
    %v54 = vld [vmem:[%s0 + $0x108] sm:$0xff]
    %v55 = vld [vmem:[%s0 + $0x110] sm:$0xff]
    %v56 = vld [vmem:[%s0 + $0x118] sm:$0xff]
    %v57 = vld [vmem:[%s0 + $0x120] sm:$0xff]
    %v58 = vld [vmem:[%s0 + $0x128] sm:$0xff]
    %v59 = vld [vmem:[%s0 + $0x130] sm:$0xff]
    %v60 = vld [vmem:[%s0 + $0x138] sm:$0xff]
    %v61 = vld [vmem:[%s0 + $0x140] sm:$0xff]
    %v62 = vld [vmem:[%s0 + $0x148] sm:$0xff]
    %v63 = vld [vmem:[%s0 + $0x150] sm:$0xff]
    %v64 = vld [vmem:[%s0 + $0x158] sm:$0xff]
    %v65 = vld [vmem:[%s0 + $0x160] sm:$0xff]
    %v66 = vld [vmem:[%s0 + $0x168] sm:$0xff]
    %v67 = vld [vmem:[%s0 + $0x170] sm:$0xff]
    %v68 = vld [vmem:[%s0 + $0x178] sm:$0xff]
    %v69 = vld [vmem:[%s0 + $0x180] sm:$0xff]
    %v70 = vld [vmem:[%s0 + $0x188] sm:$0xff]
    %v71 = vld [vmem:[%s0 + $0x190] sm:$0xff]
    %v72 = vld [vmem:[%s0 + $0x198] sm:$0xff]
    %v73 = vld [vmem:[%s0 + $0x1a0] sm:$0xff]
    %v74 = vld [vmem:[%s0 + $0x1a8] sm:$0xff]
    %v75 = vld [vmem:[%s0 + $0x1b0] sm:$0xff]
    %v76 = vld [vmem:[%s0 + $0x1b8] sm:$0xff]
    %v77 = vld [vmem:[%s0 + $0x1c0] sm:$0xff]
    %v78 = vld [vmem:[%s0 + $0x1c8] sm:$0xff]
    %v79 = vld [vmem:[%s0 + $0x1d0] sm:$0xff]
    %v80 = vld [vmem:[%s0 + $0x1d8] sm:$0xff]
    %v81 = vld [vmem:[%s0 + $0x1e0] sm:$0xff]
    %v82 = vld [vmem:[%s0 + $0x1e8] sm:$0xff]
    %v83 = vld [vmem:[%s0 + $0x1f0] sm:$0xff]
    %v84 = vld [vmem:[%s0 + $0x1f8] sm:$0xff]
    %v85 = vld [vmem:[%s1] sm:$0xff]
    %v86 = vld [vmem:[%s1 + $0x8] sm:$0xff]
    %v87 = vld [vmem:[%s3] sm:$0x1]
    %v89 = vperm.slane %v87, 0
    %vm91 = vcmask 130048
    %v93 = vsel %vm91, %v21, 0
    %v96 = vsel %vm91, %v22, 0
    %v99 = vsel %vm91, %v23, 0
    %v102 = vsel %vm91, %v24, 0
    %v105 = vsel %vm91, %v25, 0
    %v108 = vsel %vm91, %v26, 0
    %v111 = vsel %vm91, %v27, 0
    %v114 = vsel %vm91, %v28, 0
    %v117 = vsel %vm91, %v29, 0
    %v120 = vsel %vm91, %v30, 0
    %v123 = vsel %vm91, %v31, 0
    %v126 = vsel %vm91, %v32, 0
    %v129 = vsel %vm91, %v33, 0
    %v132 = vsel %vm91, %v34, 0
    %v135 = vsel %vm91, %v35, 0
    %v138 = vsel %vm91, %v36, 0
    %v141 = vsel %vm91, %v37, 0
    %v144 = vsel %vm91, %v38, 0
    %v147 = vsel %vm91, %v39, 0
    %v150 = vsel %vm91, %v40, 0
    %v153 = vsel %vm91, %v41, 0
    %v156 = vsel %vm91, %v42, 0
    %v159 = vsel %vm91, %v43, 0
    %v162 = vsel %vm91, %v44, 0
    %v165 = vsel %vm91, %v45, 0
    %v168 = vsel %vm91, %v46, 0
    %v171 = vsel %vm91, %v47, 0
    %v174 = vsel %vm91, %v48, 0
    %v177 = vsel %vm91, %v49, 0
    %v180 = vsel %vm91, %v50, 0
    %v183 = vsel %vm91, %v51, 0
    %v186 = vsel %vm91, %v52, 0
    %v189 = vsel %vm91, %v53, 0
    %v192 = vsel %vm91, %v54, 0
    %v195 = vsel %vm91, %v55, 0
    %v198 = vsel %vm91, %v56, 0
    %v201 = vsel %vm91, %v57, 0
    %v204 = vsel %vm91, %v58, 0
    %v207 = vsel %vm91, %v59, 0
    %v210 = vsel %vm91, %v60, 0
    %v213 = vsel %vm91, %v61, 0
    %v216 = vsel %vm91, %v62, 0
    %v219 = vsel %vm91, %v63, 0
    %v222 = vsel %vm91, %v64, 0
    %v225 = vsel %vm91, %v65, 0
    %v228 = vsel %vm91, %v66, 0
    %v231 = vsel %vm91, %v67, 0
    %v234 = vsel %vm91, %v68, 0
    %v237 = vsel %vm91, %v69, 0
    %v240 = vsel %vm91, %v70, 0
    %v243 = vsel %vm91, %v71, 0
    %v246 = vsel %vm91, %v72, 0
    %v249 = vsel %vm91, %v73, 0
    %v252 = vsel %vm91, %v74, 0
    %v255 = vsel %vm91, %v75, 0
    %v258 = vsel %vm91, %v76, 0
    %v261 = vsel %vm91, %v77, 0
    %v264 = vsel %vm91, %v78, 0
    %v267 = vsel %vm91, %v79, 0
    %v270 = vsel %vm91, %v80, 0
    %v273 = vsel %vm91, %v81, 0
    %v276 = vsel %vm91, %v82, 0
    %v279 = vsel %vm91, %v83, 0
    %v282 = vsel %vm91, %v84, 0
    %284 = vmatpush.msra.mxu0 0.0
    %285 = vmatpush.msra.mxu0 0.0
    %286 = vmatpush.msra.mxu0 0.0
    %287 = vmatpush.msra.mxu0 0.0
    %288 = vmatpush.msra.mxu0 0.0
    %289 = vmatpush.msra.mxu0 0.0
    %290 = vmatpush.msra.mxu0 0.0
    %291 = vmatpush.msra.mxu0 0.0
    %292 = vmatpush.msra.mxu0 0.0
    %293 = vmatpush.msra.mxu0 0.0
    %294 = vmatpush.msra.mxu0 0.0
    %295 = vmatpush.msra.mxu0 0.0
    %296 = vmatpush.msra.mxu0 0.0
    %297 = vmatpush.msra.mxu0 0.0
    %298 = vmatpush.msra.mxu0 %v86
    %299 = vmatpush.msra.mxu0 %v85
    %300 = vmatmul.f32.gmra.mxu0 %v93
    %v301 = vpop.f32.mrf.mxu0
    %v302 = vadd.f32 %v89, %v301
    %303 = vmatmul.f32.gmra.mxu0 %v96
    %v304 = vpop.f32.mrf.mxu0
    %v305 = vadd.f32 %v89, %v304
    %306 = vmatmul.f32.gmra.mxu0 %v99
    %v307 = vpop.f32.mrf.mxu0
    %v308 = vadd.f32 %v89, %v307
    %309 = vmatmul.f32.gmra.mxu0 %v102
    %v310 = vpop.f32.mrf.mxu0
    %v311 = vadd.f32 %v89, %v310
    %312 = vmatmul.f32.gmra.mxu0 %v105
    %v313 = vpop.f32.mrf.mxu0
    %v314 = vadd.f32 %v89, %v313
    %315 = vmatmul.f32.gmra.mxu0 %v108
    %v316 = vpop.f32.mrf.mxu0
    %v317 = vadd.f32 %v89, %v316
    %318 = vmatmul.f32.gmra.mxu0 %v111
    %v319 = vpop.f32.mrf.mxu0
    %v320 = vadd.f32 %v89, %v319
    %321 = vmatmul.f32.gmra.mxu0 %v114
    %v322 = vpop.f32.mrf.mxu0
    %v323 = vadd.f32 %v89, %v322
    %324 = vmatmul.f32.gmra.mxu0 %v117
    %v325 = vpop.f32.mrf.mxu0
    %v326 = vadd.f32 %v89, %v325
    %327 = vmatmul.f32.gmra.mxu0 %v120
    %v328 = vpop.f32.mrf.mxu0
    %v329 = vadd.f32 %v89, %v328
    %330 = vmatmul.f32.gmra.mxu0 %v123
    %v331 = vpop.f32.mrf.mxu0
    %v332 = vadd.f32 %v89, %v331
    %333 = vmatmul.f32.gmra.mxu0 %v126
    %v334 = vpop.f32.mrf.mxu0
    %v335 = vadd.f32 %v89, %v334
    %336 = vmatmul.f32.gmra.mxu0 %v129
    %v337 = vpop.f32.mrf.mxu0
    %v338 = vadd.f32 %v89, %v337
    %339 = vmatmul.f32.gmra.mxu0 %v132
    %v340 = vpop.f32.mrf.mxu0
    %v341 = vadd.f32 %v89, %v340
    %342 = vmatmul.f32.gmra.mxu0 %v135
    %v343 = vpop.f32.mrf.mxu0
    %v344 = vadd.f32 %v89, %v343
    %345 = vmatmul.f32.gmra.mxu0 %v138
    %v346 = vpop.f32.mrf.mxu0
    %v347 = vadd.f32 %v89, %v346
    %348 = vmatmul.f32.gmra.mxu0 %v141
    %v349 = vpop.f32.mrf.mxu0
    %v350 = vadd.f32 %v89, %v349
    %351 = vmatmul.f32.gmra.mxu0 %v144
    %v352 = vpop.f32.mrf.mxu0
    %v353 = vadd.f32 %v89, %v352
    %354 = vmatmul.f32.gmra.mxu0 %v147
    %v355 = vpop.f32.mrf.mxu0
    %v356 = vadd.f32 %v89, %v355
    %357 = vmatmul.f32.gmra.mxu0 %v150
    %v358 = vpop.f32.mrf.mxu0
    %v359 = vadd.f32 %v89, %v358
    %360 = vmatmul.f32.gmra.mxu0 %v153
    %v361 = vpop.f32.mrf.mxu0
    %v362 = vadd.f32 %v89, %v361
    %363 = vmatmul.f32.gmra.mxu0 %v156
    %v364 = vpop.f32.mrf.mxu0
    %v365 = vadd.f32 %v89, %v364
    %366 = vmatmul.f32.gmra.mxu0 %v159
    %v367 = vpop.f32.mrf.mxu0
    %v368 = vadd.f32 %v89, %v367
    %369 = vmatmul.f32.gmra.mxu0 %v162
    %v370 = vpop.f32.mrf.mxu0
    %v371 = vadd.f32 %v89, %v370
    %372 = vmatmul.f32.gmra.mxu0 %v165
    %v373 = vpop.f32.mrf.mxu0
    %v374 = vadd.f32 %v89, %v373
    %375 = vmatmul.f32.gmra.mxu0 %v168
    %v376 = vpop.f32.mrf.mxu0
    %v377 = vadd.f32 %v89, %v376
    %378 = vmatmul.f32.gmra.mxu0 %v171
    %v379 = vpop.f32.mrf.mxu0
    %v380 = vadd.f32 %v89, %v379
    %381 = vmatmul.f32.gmra.mxu0 %v174
    %v382 = vpop.f32.mrf.mxu0
    %v383 = vadd.f32 %v89, %v382
    %384 = vmatmul.f32.gmra.mxu0 %v177
    %v385 = vpop.f32.mrf.mxu0
    %v386 = vadd.f32 %v89, %v385
    %387 = vmatmul.f32.gmra.mxu0 %v180
    %v388 = vpop.f32.mrf.mxu0
    %v389 = vadd.f32 %v89, %v388
    %390 = vmatmul.f32.gmra.mxu0 %v183
    %v391 = vpop.f32.mrf.mxu0
    %v392 = vadd.f32 %v89, %v391
    %393 = vmatmul.f32.gmra.mxu0 %v186
    %v394 = vpop.f32.mrf.mxu0
    %v395 = vadd.f32 %v89, %v394
    %396 = vmatmul.f32.gmra.mxu0 %v189
    %v397 = vpop.f32.mrf.mxu0
    %v398 = vadd.f32 %v89, %v397
    %399 = vmatmul.f32.gmra.mxu0 %v192
    %v400 = vpop.f32.mrf.mxu0
    %v401 = vadd.f32 %v89, %v400
    %402 = vmatmul.f32.gmra.mxu0 %v195
    %v403 = vpop.f32.mrf.mxu0
    %v404 = vadd.f32 %v89, %v403
    %405 = vmatmul.f32.gmra.mxu0 %v198
    %v406 = vpop.f32.mrf.mxu0
    %v407 = vadd.f32 %v89, %v406
    %408 = vmatmul.f32.gmra.mxu0 %v201
    %v409 = vpop.f32.mrf.mxu0
    %v410 = vadd.f32 %v89, %v409
    %411 = vmatmul.f32.gmra.mxu0 %v204
    %v412 = vpop.f32.mrf.mxu0
    %v413 = vadd.f32 %v89, %v412
    %414 = vmatmul.f32.gmra.mxu0 %v207
    %v415 = vpop.f32.mrf.mxu0
    %v416 = vadd.f32 %v89, %v415
    %417 = vmatmul.f32.gmra.mxu0 %v210
    %v418 = vpop.f32.mrf.mxu0
    %v419 = vadd.f32 %v89, %v418
    %420 = vmatmul.f32.gmra.mxu0 %v213
    %v421 = vpop.f32.mrf.mxu0
    %v422 = vadd.f32 %v89, %v421
    %423 = vmatmul.f32.gmra.mxu0 %v216
    %v424 = vpop.f32.mrf.mxu0
    %v425 = vadd.f32 %v89, %v424
    %426 = vmatmul.f32.gmra.mxu0 %v219
    %v427 = vpop.f32.mrf.mxu0
    %v428 = vadd.f32 %v89, %v427
    %429 = vmatmul.f32.gmra.mxu0 %v222
    %v430 = vpop.f32.mrf.mxu0
    %v431 = vadd.f32 %v89, %v430
    %432 = vmatmul.f32.gmra.mxu0 %v225
    %v433 = vpop.f32.mrf.mxu0
    %v434 = vadd.f32 %v89, %v433
    %435 = vmatmul.f32.gmra.mxu0 %v228
    %v436 = vpop.f32.mrf.mxu0
    %v437 = vadd.f32 %v89, %v436
    %438 = vmatmul.f32.gmra.mxu0 %v231
    %v439 = vpop.f32.mrf.mxu0
    %v440 = vadd.f32 %v89, %v439
    %441 = vmatmul.f32.gmra.mxu0 %v234
    %v442 = vpop.f32.mrf.mxu0
    %v443 = vadd.f32 %v89, %v442
    %444 = vmatmul.f32.gmra.mxu0 %v237
    %v445 = vpop.f32.mrf.mxu0
    %v446 = vadd.f32 %v89, %v445
    %447 = vmatmul.f32.gmra.mxu0 %v240
    %v448 = vpop.f32.mrf.mxu0
    %v449 = vadd.f32 %v89, %v448
    %450 = vmatmul.f32.gmra.mxu0 %v243
    %v451 = vpop.f32.mrf.mxu0
    %v452 = vadd.f32 %v89, %v451
    %453 = vmatmul.f32.gmra.mxu0 %v246
    %v454 = vpop.f32.mrf.mxu0
    %v455 = vadd.f32 %v89, %v454
    %456 = vmatmul.f32.gmra.mxu0 %v249
    %v457 = vpop.f32.mrf.mxu0
    %v458 = vadd.f32 %v89, %v457
    %459 = vmatmul.f32.gmra.mxu0 %v252
    %v460 = vpop.f32.mrf.mxu0
    %v461 = vadd.f32 %v89, %v460
    %462 = vmatmul.f32.gmra.mxu0 %v255
    %v463 = vpop.f32.mrf.mxu0
    %v464 = vadd.f32 %v89, %v463
    %465 = vmatmul.f32.gmra.mxu0 %v258
    %v466 = vpop.f32.mrf.mxu0
    %v467 = vadd.f32 %v89, %v466
    %468 = vmatmul.f32.gmra.mxu0 %v261
    %v469 = vpop.f32.mrf.mxu0
    %v470 = vadd.f32 %v89, %v469
    %471 = vmatmul.f32.gmra.mxu0 %v264
    %v472 = vpop.f32.mrf.mxu0
    %v473 = vadd.f32 %v89, %v472
    %474 = vmatmul.f32.gmra.mxu0 %v267
    %v475 = vpop.f32.mrf.mxu0
    %v476 = vadd.f32 %v89, %v475
    %477 = vmatmul.f32.gmra.mxu0 %v270
    %v478 = vpop.f32.mrf.mxu0
    %v479 = vadd.f32 %v89, %v478
    %480 = vmatmul.f32.gmra.mxu0 %v273
    %v481 = vpop.f32.mrf.mxu0
    %v482 = vadd.f32 %v89, %v481
    %483 = vmatmul.f32.gmra.mxu0 %v276
    %v484 = vpop.f32.mrf.mxu0
    %v485 = vadd.f32 %v89, %v484
    %486 = vmatmul.f32.gmra.mxu0 %v279
    %v487 = vpop.f32.mrf.mxu0
    %v488 = vadd.f32 %v89, %v487
    %489 = vmatmul.f32.gmra.mxu0 %v282
    %v490 = vpop.f32.mrf.mxu0
    %v491 = vadd.f32 %v89, %v490
    %492 = vdwg.mxu0
    %v493 = vmax.f32 %v302, 0.0
    %v494 = vmax.f32 %v305, 0.0
    %v495 = vmax.f32 %v308, 0.0
    %v496 = vmax.f32 %v311, 0.0
    %v497 = vmax.f32 %v314, 0.0
    %v498 = vmax.f32 %v317, 0.0
    %v499 = vmax.f32 %v320, 0.0
    %v500 = vmax.f32 %v323, 0.0
    %v501 = vmax.f32 %v326, 0.0
    %v502 = vmax.f32 %v329, 0.0
    %v503 = vmax.f32 %v332, 0.0
    %v504 = vmax.f32 %v335, 0.0
    %v505 = vmax.f32 %v338, 0.0
    %v506 = vmax.f32 %v341, 0.0
    %v507 = vmax.f32 %v344, 0.0
    %v508 = vmax.f32 %v347, 0.0
    %v509 = vmax.f32 %v350, 0.0
    %v510 = vmax.f32 %v353, 0.0
    %v511 = vmax.f32 %v356, 0.0
    %v512 = vmax.f32 %v359, 0.0
    %v513 = vmax.f32 %v362, 0.0
    %v514 = vmax.f32 %v365, 0.0
    %v515 = vmax.f32 %v368, 0.0
    %v516 = vmax.f32 %v371, 0.0
    %v517 = vmax.f32 %v374, 0.0
    %v518 = vmax.f32 %v377, 0.0
    %v519 = vmax.f32 %v380, 0.0
    %v520 = vmax.f32 %v383, 0.0
    %v521 = vmax.f32 %v386, 0.0
    %v522 = vmax.f32 %v389, 0.0
    %v523 = vmax.f32 %v392, 0.0
    %v524 = vmax.f32 %v395, 0.0
    %v525 = vmax.f32 %v398, 0.0
    %v526 = vmax.f32 %v401, 0.0
    %v527 = vmax.f32 %v404, 0.0
    %v528 = vmax.f32 %v407, 0.0
    %v529 = vmax.f32 %v410, 0.0
    %v530 = vmax.f32 %v413, 0.0
    %v531 = vmax.f32 %v416, 0.0
    %v532 = vmax.f32 %v419, 0.0
    %v533 = vmax.f32 %v422, 0.0
    %v534 = vmax.f32 %v425, 0.0
    %v535 = vmax.f32 %v428, 0.0
    %v536 = vmax.f32 %v431, 0.0
    %v537 = vmax.f32 %v434, 0.0
    %v538 = vmax.f32 %v437, 0.0
    %v539 = vmax.f32 %v440, 0.0
    %v540 = vmax.f32 %v443, 0.0
    %v541 = vmax.f32 %v446, 0.0
    %v542 = vmax.f32 %v449, 0.0
    %v543 = vmax.f32 %v452, 0.0
    %v544 = vmax.f32 %v455, 0.0
    %v545 = vmax.f32 %v458, 0.0
    %v546 = vmax.f32 %v461, 0.0
    %v547 = vmax.f32 %v464, 0.0
    %v548 = vmax.f32 %v467, 0.0
    %v549 = vmax.f32 %v470, 0.0
    %v550 = vmax.f32 %v473, 0.0
    %v551 = vmax.f32 %v476, 0.0
    %v552 = vmax.f32 %v479, 0.0
    %v553 = vmax.f32 %v482, 0.0
    %v554 = vmax.f32 %v485, 0.0
    %v555 = vmax.f32 %v488, 0.0
    %v556 = vmax.f32 %v491, 0.0
    %v557 = vld [vmem:[%s2] sm:$0xff]
    %v558 = vld [vmem:[%s2 + $0x8] sm:$0xff]
    %v559 = vld [vmem:[%s2 + $0x10] sm:$0xff]
    %v560 = vld [vmem:[%s2 + $0x18] sm:$0xff]
    %v561 = vld [vmem:[%s2 + $0x20] sm:$0xff]
    %v562 = vld [vmem:[%s2 + $0x28] sm:$0xff]
    %v563 = vld [vmem:[%s2 + $0x30] sm:$0xff]
    %v564 = vld [vmem:[%s2 + $0x38] sm:$0xff]
    %v565 = vld [vmem:[%s2 + $0x40] sm:$0xff]
    %v566 = vld [vmem:[%s2 + $0x48] sm:$0xff]
    %v567 = vld [vmem:[%s2 + $0x50] sm:$0xff]
    %v568 = vld [vmem:[%s2 + $0x58] sm:$0xff]
    %v569 = vld [vmem:[%s2 + $0x60] sm:$0xff]
    %v570 = vld [vmem:[%s2 + $0x68] sm:$0xff]
    %v571 = vld [vmem:[%s2 + $0x70] sm:$0xff]
    %v572 = vld [vmem:[%s2 + $0x78] sm:$0xff]
    %v573 = vld [vmem:[%s2 + $0x80] sm:$0xff]
    %v574 = vld [vmem:[%s2 + $0x88] sm:$0xff]
    %v575 = vld [vmem:[%s2 + $0x90] sm:$0xff]
    %v576 = vld [vmem:[%s2 + $0x98] sm:$0xff]
    %v577 = vld [vmem:[%s2 + $0xa0] sm:$0xff]
    %v578 = vld [vmem:[%s2 + $0xa8] sm:$0xff]
    %v579 = vld [vmem:[%s2 + $0xb0] sm:$0xff]
    %v580 = vld [vmem:[%s2 + $0xb8] sm:$0xff]
    %v581 = vld [vmem:[%s2 + $0xc0] sm:$0xff]
    %v582 = vld [vmem:[%s2 + $0xc8] sm:$0xff]
    %v583 = vld [vmem:[%s2 + $0xd0] sm:$0xff]
    %v584 = vld [vmem:[%s2 + $0xd8] sm:$0xff]
    %v585 = vld [vmem:[%s2 + $0xe0] sm:$0xff]
    %v586 = vld [vmem:[%s2 + $0xe8] sm:$0xff]
    %v587 = vld [vmem:[%s2 + $0xf0] sm:$0xff]
    %v588 = vld [vmem:[%s2 + $0xf8] sm:$0xff]
    %v589 = vld [vmem:[%s4] sm:$0x3]
    %v591 = vperm.slane %v589, 0
    %v592 = vperm.slane %v589, 1
    %595 = vmatpush.msra.mxu0 %v587
    %596 = vmatpush.msra.mxu0 %v585
    %597 = vmatpush.msra.mxu0 %v583
    %598 = vmatpush.msra.mxu0 %v581
    %599 = vmatpush.msra.mxu0 %v579
    %600 = vmatpush.msra.mxu0 %v577
    %601 = vmatpush.msra.mxu0 %v575
    %602 = vmatpush.msra.mxu0 %v573
    %603 = vmatpush.msra.mxu0 %v571
    %604 = vmatpush.msra.mxu0 %v569
    %605 = vmatpush.msra.mxu0 %v567
    %606 = vmatpush.msra.mxu0 %v565
    %607 = vmatpush.msra.mxu0 %v563
    %608 = vmatpush.msra.mxu0 %v561
    %609 = vmatpush.msra.mxu0 %v559
    %610 = vmatpush.msra.mxu0 %v557
    %611 = vmatmul.f32.gmra.mxu0 %v493
    %v612 = vpop.f32.mrf.mxu0
    %v613 = vadd.f32 %v591, %v612
    %614 = vmatmul.f32.gmra.mxu0 %v494
    %v615 = vpop.f32.mrf.mxu0
    %v616 = vadd.f32 %v591, %v615
    %617 = vmatmul.f32.gmra.mxu0 %v495
    %v618 = vpop.f32.mrf.mxu0
    %v619 = vadd.f32 %v591, %v618
    %620 = vmatmul.f32.gmra.mxu0 %v496
    %v621 = vpop.f32.mrf.mxu0
    %v622 = vadd.f32 %v591, %v621
    %623 = vmatmul.f32.gmra.mxu0 %v497
    %v624 = vpop.f32.mrf.mxu0
    %v625 = vadd.f32 %v591, %v624
    %626 = vmatmul.f32.gmra.mxu0 %v498
    %v627 = vpop.f32.mrf.mxu0
    %v628 = vadd.f32 %v591, %v627
    %629 = vmatmul.f32.gmra.mxu0 %v499
    %v630 = vpop.f32.mrf.mxu0
    %v631 = vadd.f32 %v591, %v630
    %632 = vmatmul.f32.gmra.mxu0 %v500
    %v633 = vpop.f32.mrf.mxu0
    %v634 = vadd.f32 %v591, %v633
    %635 = vmatmul.f32.gmra.mxu0 %v501
    %v636 = vpop.f32.mrf.mxu0
    %v637 = vadd.f32 %v591, %v636
    %638 = vmatmul.f32.gmra.mxu0 %v502
    %v639 = vpop.f32.mrf.mxu0
    %v640 = vadd.f32 %v591, %v639
    %641 = vmatmul.f32.gmra.mxu0 %v503
    %v642 = vpop.f32.mrf.mxu0
    %v643 = vadd.f32 %v591, %v642
    %644 = vmatmul.f32.gmra.mxu0 %v504
    %v645 = vpop.f32.mrf.mxu0
    %v646 = vadd.f32 %v591, %v645
    %647 = vmatmul.f32.gmra.mxu0 %v505
    %v648 = vpop.f32.mrf.mxu0
    %v649 = vadd.f32 %v591, %v648
    %650 = vmatmul.f32.gmra.mxu0 %v506
    %v651 = vpop.f32.mrf.mxu0
    %v652 = vadd.f32 %v591, %v651
    %653 = vmatmul.f32.gmra.mxu0 %v507
    %v654 = vpop.f32.mrf.mxu0
    %v655 = vadd.f32 %v591, %v654
    %656 = vmatmul.f32.gmra.mxu0 %v508
    %v657 = vpop.f32.mrf.mxu0
    %v658 = vadd.f32 %v591, %v657
    %659 = vmatmul.f32.gmra.mxu0 %v509
    %v660 = vpop.f32.mrf.mxu0
    %v661 = vadd.f32 %v591, %v660
    %662 = vmatmul.f32.gmra.mxu0 %v510
    %v663 = vpop.f32.mrf.mxu0
    %v664 = vadd.f32 %v591, %v663
    %665 = vmatmul.f32.gmra.mxu0 %v511
    %v666 = vpop.f32.mrf.mxu0
    %v667 = vadd.f32 %v591, %v666
    %668 = vmatmul.f32.gmra.mxu0 %v512
    %v669 = vpop.f32.mrf.mxu0
    %v670 = vadd.f32 %v591, %v669
    %671 = vmatmul.f32.gmra.mxu0 %v513
    %v672 = vpop.f32.mrf.mxu0
    %v673 = vadd.f32 %v591, %v672
    %674 = vmatmul.f32.gmra.mxu0 %v514
    %v675 = vpop.f32.mrf.mxu0
    %v676 = vadd.f32 %v591, %v675
    %677 = vmatmul.f32.gmra.mxu0 %v515
    %v678 = vpop.f32.mrf.mxu0
    %v679 = vadd.f32 %v591, %v678
    %680 = vmatmul.f32.gmra.mxu0 %v516
    %v681 = vpop.f32.mrf.mxu0
    %v682 = vadd.f32 %v591, %v681
    %683 = vmatmul.f32.gmra.mxu0 %v517
    %v684 = vpop.f32.mrf.mxu0
    %v685 = vadd.f32 %v591, %v684
    %686 = vmatmul.f32.gmra.mxu0 %v518
    %v687 = vpop.f32.mrf.mxu0
    %v688 = vadd.f32 %v591, %v687
    %689 = vmatmul.f32.gmra.mxu0 %v519
    %v690 = vpop.f32.mrf.mxu0
    %v691 = vadd.f32 %v591, %v690
    %692 = vmatmul.f32.gmra.mxu0 %v520
    %v693 = vpop.f32.mrf.mxu0
    %v694 = vadd.f32 %v591, %v693
    %695 = vmatmul.f32.gmra.mxu0 %v521
    %v696 = vpop.f32.mrf.mxu0
    %v697 = vadd.f32 %v591, %v696
    %698 = vmatmul.f32.gmra.mxu0 %v522
    %v699 = vpop.f32.mrf.mxu0
    %v700 = vadd.f32 %v591, %v699
    %701 = vmatmul.f32.gmra.mxu0 %v523
    %v702 = vpop.f32.mrf.mxu0
    %v703 = vadd.f32 %v591, %v702
    %704 = vmatmul.f32.gmra.mxu0 %v524
    %v705 = vpop.f32.mrf.mxu0
    %v706 = vadd.f32 %v591, %v705
    %707 = vmatmul.f32.gmra.mxu0 %v525
    %v708 = vpop.f32.mrf.mxu0
    %v709 = vadd.f32 %v591, %v708
    %710 = vmatmul.f32.gmra.mxu0 %v526
    %v711 = vpop.f32.mrf.mxu0
    %v712 = vadd.f32 %v591, %v711
    %713 = vmatmul.f32.gmra.mxu0 %v527
    %v714 = vpop.f32.mrf.mxu0
    %v715 = vadd.f32 %v591, %v714
    %716 = vmatmul.f32.gmra.mxu0 %v528
    %v717 = vpop.f32.mrf.mxu0
    %v718 = vadd.f32 %v591, %v717
    %719 = vmatmul.f32.gmra.mxu0 %v529
    %v720 = vpop.f32.mrf.mxu0
    %v721 = vadd.f32 %v591, %v720
    %722 = vmatmul.f32.gmra.mxu0 %v530
    %v723 = vpop.f32.mrf.mxu0
    %v724 = vadd.f32 %v591, %v723
    %725 = vmatmul.f32.gmra.mxu0 %v531
    %v726 = vpop.f32.mrf.mxu0
    %v727 = vadd.f32 %v591, %v726
    %728 = vmatmul.f32.gmra.mxu0 %v532
    %v729 = vpop.f32.mrf.mxu0
    %v730 = vadd.f32 %v591, %v729
    %731 = vmatmul.f32.gmra.mxu0 %v533
    %v732 = vpop.f32.mrf.mxu0
    %v733 = vadd.f32 %v591, %v732
    %734 = vmatmul.f32.gmra.mxu0 %v534
    %v735 = vpop.f32.mrf.mxu0
    %v736 = vadd.f32 %v591, %v735
    %737 = vmatmul.f32.gmra.mxu0 %v535
    %v738 = vpop.f32.mrf.mxu0
    %v739 = vadd.f32 %v591, %v738
    %740 = vmatmul.f32.gmra.mxu0 %v536
    %v741 = vpop.f32.mrf.mxu0
    %v742 = vadd.f32 %v591, %v741
    %743 = vmatmul.f32.gmra.mxu0 %v537
    %v744 = vpop.f32.mrf.mxu0
    %v745 = vadd.f32 %v591, %v744
    %746 = vmatmul.f32.gmra.mxu0 %v538
    %v747 = vpop.f32.mrf.mxu0
    %v748 = vadd.f32 %v591, %v747
    %749 = vmatmul.f32.gmra.mxu0 %v539
    %v750 = vpop.f32.mrf.mxu0
    %v751 = vadd.f32 %v591, %v750
    %752 = vmatmul.f32.gmra.mxu0 %v540
    %v753 = vpop.f32.mrf.mxu0
    %v754 = vadd.f32 %v591, %v753
    %755 = vmatmul.f32.gmra.mxu0 %v541
    %v756 = vpop.f32.mrf.mxu0
    %v757 = vadd.f32 %v591, %v756
    %758 = vmatmul.f32.gmra.mxu0 %v542
    %v759 = vpop.f32.mrf.mxu0
    %v760 = vadd.f32 %v591, %v759
    %761 = vmatmul.f32.gmra.mxu0 %v543
    %v762 = vpop.f32.mrf.mxu0
    %v763 = vadd.f32 %v591, %v762
    %764 = vmatmul.f32.gmra.mxu0 %v544
    %v765 = vpop.f32.mrf.mxu0
    %v766 = vadd.f32 %v591, %v765
    %767 = vmatmul.f32.gmra.mxu0 %v545
    %v768 = vpop.f32.mrf.mxu0
    %v769 = vadd.f32 %v591, %v768
    %770 = vmatmul.f32.gmra.mxu0 %v546
    %v771 = vpop.f32.mrf.mxu0
    %v772 = vadd.f32 %v591, %v771
    %773 = vmatmul.f32.gmra.mxu0 %v547
    %v774 = vpop.f32.mrf.mxu0
    %v775 = vadd.f32 %v591, %v774
    %776 = vmatmul.f32.gmra.mxu0 %v548
    %v777 = vpop.f32.mrf.mxu0
    %v778 = vadd.f32 %v591, %v777
    %779 = vmatmul.f32.gmra.mxu0 %v549
    %v780 = vpop.f32.mrf.mxu0
    %v781 = vadd.f32 %v591, %v780
    %782 = vmatmul.f32.gmra.mxu0 %v550
    %v783 = vpop.f32.mrf.mxu0
    %v784 = vadd.f32 %v591, %v783
    %785 = vmatmul.f32.gmra.mxu0 %v551
    %v786 = vpop.f32.mrf.mxu0
    %v787 = vadd.f32 %v591, %v786
    %788 = vmatmul.f32.gmra.mxu0 %v552
    %v789 = vpop.f32.mrf.mxu0
    %v790 = vadd.f32 %v591, %v789
    %791 = vmatmul.f32.gmra.mxu0 %v553
    %v792 = vpop.f32.mrf.mxu0
    %v793 = vadd.f32 %v591, %v792
    %794 = vmatmul.f32.gmra.mxu0 %v554
    %v795 = vpop.f32.mrf.mxu0
    %v796 = vadd.f32 %v591, %v795
    %797 = vmatmul.f32.gmra.mxu0 %v555
    %v798 = vpop.f32.mrf.mxu0
    %v799 = vadd.f32 %v591, %v798
    %800 = vmatmul.f32.gmra.mxu0 %v556
    %v801 = vpop.f32.mrf.mxu0
    %v802 = vadd.f32 %v591, %v801
    %803 = vdwg.mxu0
    %804 = vmatpush.msra.mxu0 %v588
    %805 = vmatpush.msra.mxu0 %v586
    %806 = vmatpush.msra.mxu0 %v584
    %807 = vmatpush.msra.mxu0 %v582
    %808 = vmatpush.msra.mxu0 %v580
    %809 = vmatpush.msra.mxu0 %v578
    %810 = vmatpush.msra.mxu0 %v576
    %811 = vmatpush.msra.mxu0 %v574
    %812 = vmatpush.msra.mxu0 %v572
    %813 = vmatpush.msra.mxu0 %v570
    %814 = vmatpush.msra.mxu0 %v568
    %815 = vmatpush.msra.mxu0 %v566
    %816 = vmatpush.msra.mxu0 %v564
    %817 = vmatpush.msra.mxu0 %v562
    %818 = vmatpush.msra.mxu0 %v560
    %819 = vmatpush.msra.mxu0 %v558
    %820 = vmatmul.f32.gmra.mxu0 %v493
    %v821 = vpop.f32.mrf.mxu0
    %v822 = vadd.f32 %v592, %v821
    %823 = vmatmul.f32.gmra.mxu0 %v494
    %v824 = vpop.f32.mrf.mxu0
    %v825 = vadd.f32 %v592, %v824
    %826 = vmatmul.f32.gmra.mxu0 %v495
    %v827 = vpop.f32.mrf.mxu0
    %v828 = vadd.f32 %v592, %v827
    %829 = vmatmul.f32.gmra.mxu0 %v496
    %v830 = vpop.f32.mrf.mxu0
    %v831 = vadd.f32 %v592, %v830
    %832 = vmatmul.f32.gmra.mxu0 %v497
    %v833 = vpop.f32.mrf.mxu0
    %v834 = vadd.f32 %v592, %v833
    %835 = vmatmul.f32.gmra.mxu0 %v498
    %v836 = vpop.f32.mrf.mxu0
    %v837 = vadd.f32 %v592, %v836
    %838 = vmatmul.f32.gmra.mxu0 %v499
    %v839 = vpop.f32.mrf.mxu0
    %v840 = vadd.f32 %v592, %v839
    %841 = vmatmul.f32.gmra.mxu0 %v500
    %v842 = vpop.f32.mrf.mxu0
    %v843 = vadd.f32 %v592, %v842
    %844 = vmatmul.f32.gmra.mxu0 %v501
    %v845 = vpop.f32.mrf.mxu0
    %v846 = vadd.f32 %v592, %v845
    %847 = vmatmul.f32.gmra.mxu0 %v502
    %v848 = vpop.f32.mrf.mxu0
    %v849 = vadd.f32 %v592, %v848
    %850 = vmatmul.f32.gmra.mxu0 %v503
    %v851 = vpop.f32.mrf.mxu0
    %v852 = vadd.f32 %v592, %v851
    %853 = vmatmul.f32.gmra.mxu0 %v504
    %v854 = vpop.f32.mrf.mxu0
    %v855 = vadd.f32 %v592, %v854
    %856 = vmatmul.f32.gmra.mxu0 %v505
    %v857 = vpop.f32.mrf.mxu0
    %v858 = vadd.f32 %v592, %v857
    %859 = vmatmul.f32.gmra.mxu0 %v506
    %v860 = vpop.f32.mrf.mxu0
    %v861 = vadd.f32 %v592, %v860
    %862 = vmatmul.f32.gmra.mxu0 %v507
    %v863 = vpop.f32.mrf.mxu0
    %v864 = vadd.f32 %v592, %v863
    %865 = vmatmul.f32.gmra.mxu0 %v508
    %v866 = vpop.f32.mrf.mxu0
    %v867 = vadd.f32 %v592, %v866
    %868 = vmatmul.f32.gmra.mxu0 %v509
    %v869 = vpop.f32.mrf.mxu0
    %v870 = vadd.f32 %v592, %v869
    %871 = vmatmul.f32.gmra.mxu0 %v510
    %v872 = vpop.f32.mrf.mxu0
    %v873 = vadd.f32 %v592, %v872
    %874 = vmatmul.f32.gmra.mxu0 %v511
    %v875 = vpop.f32.mrf.mxu0
    %v876 = vadd.f32 %v592, %v875
    %877 = vmatmul.f32.gmra.mxu0 %v512
    %v878 = vpop.f32.mrf.mxu0
    %v879 = vadd.f32 %v592, %v878
    %880 = vmatmul.f32.gmra.mxu0 %v513
    %v881 = vpop.f32.mrf.mxu0
    %v882 = vadd.f32 %v592, %v881
    %883 = vmatmul.f32.gmra.mxu0 %v514
    %v884 = vpop.f32.mrf.mxu0
    %v885 = vadd.f32 %v592, %v884
    %886 = vmatmul.f32.gmra.mxu0 %v515
    %v887 = vpop.f32.mrf.mxu0
    %v888 = vadd.f32 %v592, %v887
    %889 = vmatmul.f32.gmra.mxu0 %v516
    %v890 = vpop.f32.mrf.mxu0
    %v891 = vadd.f32 %v592, %v890
    %892 = vmatmul.f32.gmra.mxu0 %v517
    %v893 = vpop.f32.mrf.mxu0
    %v894 = vadd.f32 %v592, %v893
    %895 = vmatmul.f32.gmra.mxu0 %v518
    %v896 = vpop.f32.mrf.mxu0
    %v897 = vadd.f32 %v592, %v896
    %898 = vmatmul.f32.gmra.mxu0 %v519
    %v899 = vpop.f32.mrf.mxu0
    %v900 = vadd.f32 %v592, %v899
    %901 = vmatmul.f32.gmra.mxu0 %v520
    %v902 = vpop.f32.mrf.mxu0
    %v903 = vadd.f32 %v592, %v902
    %904 = vmatmul.f32.gmra.mxu0 %v521
    %v905 = vpop.f32.mrf.mxu0
    %v906 = vadd.f32 %v592, %v905
    %907 = vmatmul.f32.gmra.mxu0 %v522
    %v908 = vpop.f32.mrf.mxu0
    %v909 = vadd.f32 %v592, %v908
    %910 = vmatmul.f32.gmra.mxu0 %v523
    %v911 = vpop.f32.mrf.mxu0
    %v912 = vadd.f32 %v592, %v911
    %913 = vmatmul.f32.gmra.mxu0 %v524
    %v914 = vpop.f32.mrf.mxu0
    %v915 = vadd.f32 %v592, %v914
    %916 = vmatmul.f32.gmra.mxu0 %v525
    %v917 = vpop.f32.mrf.mxu0
    %v918 = vadd.f32 %v592, %v917
    %919 = vmatmul.f32.gmra.mxu0 %v526
    %v920 = vpop.f32.mrf.mxu0
    %v921 = vadd.f32 %v592, %v920
    %922 = vmatmul.f32.gmra.mxu0 %v527
    %v923 = vpop.f32.mrf.mxu0
    %v924 = vadd.f32 %v592, %v923
    %925 = vmatmul.f32.gmra.mxu0 %v528
    %v926 = vpop.f32.mrf.mxu0
    %v927 = vadd.f32 %v592, %v926
    %928 = vmatmul.f32.gmra.mxu0 %v529
    %v929 = vpop.f32.mrf.mxu0
    %v930 = vadd.f32 %v592, %v929
    %931 = vmatmul.f32.gmra.mxu0 %v530
    %v932 = vpop.f32.mrf.mxu0
    %v933 = vadd.f32 %v592, %v932
    %934 = vmatmul.f32.gmra.mxu0 %v531
    %v935 = vpop.f32.mrf.mxu0
    %v936 = vadd.f32 %v592, %v935
    %937 = vmatmul.f32.gmra.mxu0 %v532
    %v938 = vpop.f32.mrf.mxu0
    %v939 = vadd.f32 %v592, %v938
    %940 = vmatmul.f32.gmra.mxu0 %v533
    %v941 = vpop.f32.mrf.mxu0
    %v942 = vadd.f32 %v592, %v941
    %943 = vmatmul.f32.gmra.mxu0 %v534
    %v944 = vpop.f32.mrf.mxu0
    %v945 = vadd.f32 %v592, %v944
    %946 = vmatmul.f32.gmra.mxu0 %v535
    %v947 = vpop.f32.mrf.mxu0
    %v948 = vadd.f32 %v592, %v947
    %949 = vmatmul.f32.gmra.mxu0 %v536
    %v950 = vpop.f32.mrf.mxu0
    %v951 = vadd.f32 %v592, %v950
    %952 = vmatmul.f32.gmra.mxu0 %v537
    %v953 = vpop.f32.mrf.mxu0
    %v954 = vadd.f32 %v592, %v953
    %955 = vmatmul.f32.gmra.mxu0 %v538
    %v956 = vpop.f32.mrf.mxu0
    %v957 = vadd.f32 %v592, %v956
    %958 = vmatmul.f32.gmra.mxu0 %v539
    %v959 = vpop.f32.mrf.mxu0
    %v960 = vadd.f32 %v592, %v959
    %961 = vmatmul.f32.gmra.mxu0 %v540
    %v962 = vpop.f32.mrf.mxu0
    %v963 = vadd.f32 %v592, %v962
    %964 = vmatmul.f32.gmra.mxu0 %v541
    %v965 = vpop.f32.mrf.mxu0
    %v966 = vadd.f32 %v592, %v965
    %967 = vmatmul.f32.gmra.mxu0 %v542
    %v968 = vpop.f32.mrf.mxu0
    %v969 = vadd.f32 %v592, %v968
    %970 = vmatmul.f32.gmra.mxu0 %v543
    %v971 = vpop.f32.mrf.mxu0
    %v972 = vadd.f32 %v592, %v971
    %973 = vmatmul.f32.gmra.mxu0 %v544
    %v974 = vpop.f32.mrf.mxu0
    %v975 = vadd.f32 %v592, %v974
    %976 = vmatmul.f32.gmra.mxu0 %v545
    %v977 = vpop.f32.mrf.mxu0
    %v978 = vadd.f32 %v592, %v977
    %979 = vmatmul.f32.gmra.mxu0 %v546
    %v980 = vpop.f32.mrf.mxu0
    %v981 = vadd.f32 %v592, %v980
    %982 = vmatmul.f32.gmra.mxu0 %v547
    %v983 = vpop.f32.mrf.mxu0
    %v984 = vadd.f32 %v592, %v983
    %985 = vmatmul.f32.gmra.mxu0 %v548
    %v986 = vpop.f32.mrf.mxu0
    %v987 = vadd.f32 %v592, %v986
    %988 = vmatmul.f32.gmra.mxu0 %v549
    %v989 = vpop.f32.mrf.mxu0
    %v990 = vadd.f32 %v592, %v989
    %991 = vmatmul.f32.gmra.mxu0 %v550
    %v992 = vpop.f32.mrf.mxu0
    %v993 = vadd.f32 %v592, %v992
    %994 = vmatmul.f32.gmra.mxu0 %v551
    %v995 = vpop.f32.mrf.mxu0
    %v996 = vadd.f32 %v592, %v995
    %997 = vmatmul.f32.gmra.mxu0 %v552
    %v998 = vpop.f32.mrf.mxu0
    %v999 = vadd.f32 %v592, %v998
    %1000 = vmatmul.f32.gmra.mxu0 %v553
    %v1001 = vpop.f32.mrf.mxu0
    %v1002 = vadd.f32 %v592, %v1001
    %1003 = vmatmul.f32.gmra.mxu0 %v554
    %v1004 = vpop.f32.mrf.mxu0
    %v1005 = vadd.f32 %v592, %v1004
    %1006 = vmatmul.f32.gmra.mxu0 %v555
    %v1007 = vpop.f32.mrf.mxu0
    %v1008 = vadd.f32 %v592, %v1007
    %1009 = vmatmul.f32.gmra.mxu0 %v556
    %v1010 = vpop.f32.mrf.mxu0
    %v1011 = vadd.f32 %v592, %v1010
    %1012 = vdwg.mxu0
    %v1013 = vmul.f32 %v613, 0.5
    %v1014 = vmul.f32 %v822, 0.5
    %v1015 = vmul.f32 %v616, 0.5
    %v1016 = vmul.f32 %v825, 0.5
    %v1017 = vmul.f32 %v619, 0.5
    %v1018 = vmul.f32 %v828, 0.5
    %v1019 = vmul.f32 %v622, 0.5
    %v1020 = vmul.f32 %v831, 0.5
    %v1021 = vmul.f32 %v625, 0.5
    %v1022 = vmul.f32 %v834, 0.5
    %v1023 = vmul.f32 %v628, 0.5
    %v1024 = vmul.f32 %v837, 0.5
    %v1025 = vmul.f32 %v631, 0.5
    %v1026 = vmul.f32 %v840, 0.5
    %v1027 = vmul.f32 %v634, 0.5
    %v1028 = vmul.f32 %v843, 0.5
    %v1029 = vmul.f32 %v637, 0.5
    %v1030 = vmul.f32 %v846, 0.5
    %v1031 = vmul.f32 %v640, 0.5
    %v1032 = vmul.f32 %v849, 0.5
    %v1033 = vmul.f32 %v643, 0.5
    %v1034 = vmul.f32 %v852, 0.5
    %v1035 = vmul.f32 %v646, 0.5
    %v1036 = vmul.f32 %v855, 0.5
    %v1037 = vmul.f32 %v649, 0.5
    %v1038 = vmul.f32 %v858, 0.5
    %v1039 = vmul.f32 %v652, 0.5
    %v1040 = vmul.f32 %v861, 0.5
    %v1041 = vmul.f32 %v655, 0.5
    %v1042 = vmul.f32 %v864, 0.5
    %v1043 = vmul.f32 %v658, 0.5
    %v1044 = vmul.f32 %v867, 0.5
    %v1045 = vmul.f32 %v661, 0.5
    %v1046 = vmul.f32 %v870, 0.5
    %v1047 = vmul.f32 %v664, 0.5
    %v1048 = vmul.f32 %v873, 0.5
    %v1049 = vmul.f32 %v667, 0.5
    %v1050 = vmul.f32 %v876, 0.5
    %v1051 = vmul.f32 %v670, 0.5
    %v1052 = vmul.f32 %v879, 0.5
    %v1053 = vmul.f32 %v673, 0.5
    %v1054 = vmul.f32 %v882, 0.5
    %v1055 = vmul.f32 %v676, 0.5
    %v1056 = vmul.f32 %v885, 0.5
    %v1057 = vmul.f32 %v679, 0.5
    %v1058 = vmul.f32 %v888, 0.5
    %v1059 = vmul.f32 %v682, 0.5
    %v1060 = vmul.f32 %v891, 0.5
    %v1061 = vmul.f32 %v685, 0.5
    %v1062 = vmul.f32 %v894, 0.5
    %v1063 = vmul.f32 %v688, 0.5
    %v1064 = vmul.f32 %v897, 0.5
    %v1065 = vmul.f32 %v691, 0.5
    %v1066 = vmul.f32 %v900, 0.5
    %v1067 = vmul.f32 %v694, 0.5
    %v1068 = vmul.f32 %v903, 0.5
    %v1069 = vmul.f32 %v697, 0.5
    %v1070 = vmul.f32 %v906, 0.5
    %v1071 = vmul.f32 %v700, 0.5
    %v1072 = vmul.f32 %v909, 0.5
    %v1073 = vmul.f32 %v703, 0.5
    %v1074 = vmul.f32 %v912, 0.5
    %v1075 = vmul.f32 %v706, 0.5
    %v1076 = vmul.f32 %v915, 0.5
    %v1077 = vmul.f32 %v709, 0.5
    %v1078 = vmul.f32 %v918, 0.5
    %v1079 = vmul.f32 %v712, 0.5
    %v1080 = vmul.f32 %v921, 0.5
    %v1081 = vmul.f32 %v715, 0.5
    %v1082 = vmul.f32 %v924, 0.5
    %v1083 = vmul.f32 %v718, 0.5
    %v1084 = vmul.f32 %v927, 0.5
    %v1085 = vmul.f32 %v721, 0.5
    %v1086 = vmul.f32 %v930, 0.5
    %v1087 = vmul.f32 %v724, 0.5
    %v1088 = vmul.f32 %v933, 0.5
    %v1089 = vmul.f32 %v727, 0.5
    %v1090 = vmul.f32 %v936, 0.5
    %v1091 = vmul.f32 %v730, 0.5
    %v1092 = vmul.f32 %v939, 0.5
    %v1093 = vmul.f32 %v733, 0.5
    %v1094 = vmul.f32 %v942, 0.5
    %v1095 = vmul.f32 %v736, 0.5
    %v1096 = vmul.f32 %v945, 0.5
    %v1097 = vmul.f32 %v739, 0.5
    %v1098 = vmul.f32 %v948, 0.5
    %v1099 = vmul.f32 %v742, 0.5
    %v1100 = vmul.f32 %v951, 0.5
    %v1101 = vmul.f32 %v745, 0.5
    %v1102 = vmul.f32 %v954, 0.5
    %v1103 = vmul.f32 %v748, 0.5
    %v1104 = vmul.f32 %v957, 0.5
    %v1105 = vmul.f32 %v751, 0.5
    %v1106 = vmul.f32 %v960, 0.5
    %v1107 = vmul.f32 %v754, 0.5
    %v1108 = vmul.f32 %v963, 0.5
    %v1109 = vmul.f32 %v757, 0.5
    %v1110 = vmul.f32 %v966, 0.5
    %v1111 = vmul.f32 %v760, 0.5
    %v1112 = vmul.f32 %v969, 0.5
    %v1113 = vmul.f32 %v763, 0.5
    %v1114 = vmul.f32 %v972, 0.5
    %v1115 = vmul.f32 %v766, 0.5
    %v1116 = vmul.f32 %v975, 0.5
    %v1117 = vmul.f32 %v769, 0.5
    %v1118 = vmul.f32 %v978, 0.5
    %v1119 = vmul.f32 %v772, 0.5
    %v1120 = vmul.f32 %v981, 0.5
    %v1121 = vmul.f32 %v775, 0.5
    %v1122 = vmul.f32 %v984, 0.5
    %v1123 = vmul.f32 %v778, 0.5
    %v1124 = vmul.f32 %v987, 0.5
    %v1125 = vmul.f32 %v781, 0.5
    %v1126 = vmul.f32 %v990, 0.5
    %v1127 = vmul.f32 %v784, 0.5
    %v1128 = vmul.f32 %v993, 0.5
    %v1129 = vmul.f32 %v787, 0.5
    %v1130 = vmul.f32 %v996, 0.5
    %v1131 = vmul.f32 %v790, 0.5
    %v1132 = vmul.f32 %v999, 0.5
    %v1133 = vmul.f32 %v793, 0.5
    %v1134 = vmul.f32 %v1002, 0.5
    %v1135 = vmul.f32 %v796, 0.5
    %v1136 = vmul.f32 %v1005, 0.5
    %v1137 = vmul.f32 %v799, 0.5
    %v1138 = vmul.f32 %v1008, 0.5
    %v1139 = vmul.f32 %v802, 0.5
    %v1140 = vmul.f32 %v1011, 0.5
    %v1141 = vtanh.pop %v1013
    %v1142 = vtanh.pop %v1014
    %v1143 = vtanh.pop %v1015
    %v1144 = vtanh.pop %v1016
    %v1145 = vtanh.pop %v1017
    %v1146 = vtanh.pop %v1018
    %v1147 = vtanh.pop %v1019
    %v1148 = vtanh.pop %v1020
    %v1149 = vtanh.pop %v1021
    %v1150 = vtanh.pop %v1022
    %v1151 = vtanh.pop %v1023
    %v1152 = vtanh.pop %v1024
    %v1153 = vtanh.pop %v1025
    %v1154 = vtanh.pop %v1026
    %v1155 = vtanh.pop %v1027
    %v1156 = vtanh.pop %v1028
    %v1157 = vtanh.pop %v1029
    %v1158 = vtanh.pop %v1030
    %v1159 = vtanh.pop %v1031
    %v1160 = vtanh.pop %v1032
    %v1161 = vtanh.pop %v1033
    %v1162 = vtanh.pop %v1034
    %v1163 = vtanh.pop %v1035
    %v1164 = vtanh.pop %v1036
    %v1165 = vtanh.pop %v1037
    %v1166 = vtanh.pop %v1038
    %v1167 = vtanh.pop %v1039
    %v1168 = vtanh.pop %v1040
    %v1169 = vtanh.pop %v1041
    %v1170 = vtanh.pop %v1042
    %v1171 = vtanh.pop %v1043
    %v1172 = vtanh.pop %v1044
    %v1173 = vtanh.pop %v1045
    %v1174 = vtanh.pop %v1046
    %v1175 = vtanh.pop %v1047
    %v1176 = vtanh.pop %v1048
    %v1177 = vtanh.pop %v1049
    %v1178 = vtanh.pop %v1050
    %v1179 = vtanh.pop %v1051
    %v1180 = vtanh.pop %v1052
    %v1181 = vtanh.pop %v1053
    %v1182 = vtanh.pop %v1054
    %v1183 = vtanh.pop %v1055
    %v1184 = vtanh.pop %v1056
    %v1185 = vtanh.pop %v1057
    %v1186 = vtanh.pop %v1058
    %v1187 = vtanh.pop %v1059
    %v1188 = vtanh.pop %v1060
    %v1189 = vtanh.pop %v1061
    %v1190 = vtanh.pop %v1062
    %v1191 = vtanh.pop %v1063
    %v1192 = vtanh.pop %v1064
    %v1193 = vtanh.pop %v1065
    %v1194 = vtanh.pop %v1066
    %v1195 = vtanh.pop %v1067
    %v1196 = vtanh.pop %v1068
    %v1197 = vtanh.pop %v1069
    %v1198 = vtanh.pop %v1070
    %v1199 = vtanh.pop %v1071
    %v1200 = vtanh.pop %v1072
    %v1201 = vtanh.pop %v1073
    %v1202 = vtanh.pop %v1074
    %v1203 = vtanh.pop %v1075
    %v1204 = vtanh.pop %v1076
    %v1205 = vtanh.pop %v1077
    %v1206 = vtanh.pop %v1078
    %v1207 = vtanh.pop %v1079
    %v1208 = vtanh.pop %v1080
    %v1209 = vtanh.pop %v1081
    %v1210 = vtanh.pop %v1082
    %v1211 = vtanh.pop %v1083
    %v1212 = vtanh.pop %v1084
    %v1213 = vtanh.pop %v1085
    %v1214 = vtanh.pop %v1086
    %v1215 = vtanh.pop %v1087
    %v1216 = vtanh.pop %v1088
    %v1217 = vtanh.pop %v1089
    %v1218 = vtanh.pop %v1090
    %v1219 = vtanh.pop %v1091
    %v1220 = vtanh.pop %v1092
    %v1221 = vtanh.pop %v1093
    %v1222 = vtanh.pop %v1094
    %v1223 = vtanh.pop %v1095
    %v1224 = vtanh.pop %v1096
    %v1225 = vtanh.pop %v1097
    %v1226 = vtanh.pop %v1098
    %v1227 = vtanh.pop %v1099
    %v1228 = vtanh.pop %v1100
    %v1229 = vtanh.pop %v1101
    %v1230 = vtanh.pop %v1102
    %v1231 = vtanh.pop %v1103
    %v1232 = vtanh.pop %v1104
    %v1233 = vtanh.pop %v1105
    %v1234 = vtanh.pop %v1106
    %v1235 = vtanh.pop %v1107
    %v1236 = vtanh.pop %v1108
    %v1237 = vtanh.pop %v1109
    %v1238 = vtanh.pop %v1110
    %v1239 = vtanh.pop %v1111
    %v1240 = vtanh.pop %v1112
    %v1241 = vtanh.pop %v1113
    %v1242 = vtanh.pop %v1114
    %v1243 = vtanh.pop %v1115
    %v1244 = vtanh.pop %v1116
    %v1245 = vtanh.pop %v1117
    %v1246 = vtanh.pop %v1118
    %v1247 = vtanh.pop %v1119
    %v1248 = vtanh.pop %v1120
    %v1249 = vtanh.pop %v1121
    %v1250 = vtanh.pop %v1122
    %v1251 = vtanh.pop %v1123
    %v1252 = vtanh.pop %v1124
    %v1253 = vtanh.pop %v1125
    %v1254 = vtanh.pop %v1126
    %v1255 = vtanh.pop %v1127
    %v1256 = vtanh.pop %v1128
    %v1257 = vtanh.pop %v1129
    %v1258 = vtanh.pop %v1130
    %v1259 = vtanh.pop %v1131
    %v1260 = vtanh.pop %v1132
    %v1261 = vtanh.pop %v1133
    %v1262 = vtanh.pop %v1134
    %v1263 = vtanh.pop %v1135
    %v1264 = vtanh.pop %v1136
    %v1265 = vtanh.pop %v1137
    %v1266 = vtanh.pop %v1138
    %v1267 = vtanh.pop %v1139
    %v1268 = vtanh.pop %v1140
    %v1269 = vadd.f32 %v1141, 1.0
    %v1270 = vadd.f32 %v1142, 1.0
    %v1271 = vadd.f32 %v1143, 1.0
    %v1272 = vadd.f32 %v1144, 1.0
    %v1273 = vadd.f32 %v1145, 1.0
    %v1274 = vadd.f32 %v1146, 1.0
    %v1275 = vadd.f32 %v1147, 1.0
    %v1276 = vadd.f32 %v1148, 1.0
    %v1277 = vadd.f32 %v1149, 1.0
    %v1278 = vadd.f32 %v1150, 1.0
    %v1279 = vadd.f32 %v1151, 1.0
    %v1280 = vadd.f32 %v1152, 1.0
    %v1281 = vadd.f32 %v1153, 1.0
    %v1282 = vadd.f32 %v1154, 1.0
    %v1283 = vadd.f32 %v1155, 1.0
    %v1284 = vadd.f32 %v1156, 1.0
    %v1285 = vadd.f32 %v1157, 1.0
    %v1286 = vadd.f32 %v1158, 1.0
    %v1287 = vadd.f32 %v1159, 1.0
    %v1288 = vadd.f32 %v1160, 1.0
    %v1289 = vadd.f32 %v1161, 1.0
    %v1290 = vadd.f32 %v1162, 1.0
    %v1291 = vadd.f32 %v1163, 1.0
    %v1292 = vadd.f32 %v1164, 1.0
    %v1293 = vadd.f32 %v1165, 1.0
    %v1294 = vadd.f32 %v1166, 1.0
    %v1295 = vadd.f32 %v1167, 1.0
    %v1296 = vadd.f32 %v1168, 1.0
    %v1297 = vadd.f32 %v1169, 1.0
    %v1298 = vadd.f32 %v1170, 1.0
    %v1299 = vadd.f32 %v1171, 1.0
    %v1300 = vadd.f32 %v1172, 1.0
    %v1301 = vadd.f32 %v1173, 1.0
    %v1302 = vadd.f32 %v1174, 1.0
    %v1303 = vadd.f32 %v1175, 1.0
    %v1304 = vadd.f32 %v1176, 1.0
    %v1305 = vadd.f32 %v1177, 1.0
    %v1306 = vadd.f32 %v1178, 1.0
    %v1307 = vadd.f32 %v1179, 1.0
    %v1308 = vadd.f32 %v1180, 1.0
    %v1309 = vadd.f32 %v1181, 1.0
    %v1310 = vadd.f32 %v1182, 1.0
    %v1311 = vadd.f32 %v1183, 1.0
    %v1312 = vadd.f32 %v1184, 1.0
    %v1313 = vadd.f32 %v1185, 1.0
    %v1314 = vadd.f32 %v1186, 1.0
    %v1315 = vadd.f32 %v1187, 1.0
    %v1316 = vadd.f32 %v1188, 1.0
    %v1317 = vadd.f32 %v1189, 1.0
    %v1318 = vadd.f32 %v1190, 1.0
    %v1319 = vadd.f32 %v1191, 1.0
    %v1320 = vadd.f32 %v1192, 1.0
    %v1321 = vadd.f32 %v1193, 1.0
    %v1322 = vadd.f32 %v1194, 1.0
    %v1323 = vadd.f32 %v1195, 1.0
    %v1324 = vadd.f32 %v1196, 1.0
    %v1325 = vadd.f32 %v1197, 1.0
    %v1326 = vadd.f32 %v1198, 1.0
    %v1327 = vadd.f32 %v1199, 1.0
    %v1328 = vadd.f32 %v1200, 1.0
    %v1329 = vadd.f32 %v1201, 1.0
    %v1330 = vadd.f32 %v1202, 1.0
    %v1331 = vadd.f32 %v1203, 1.0
    %v1332 = vadd.f32 %v1204, 1.0
    %v1333 = vadd.f32 %v1205, 1.0
    %v1334 = vadd.f32 %v1206, 1.0
    %v1335 = vadd.f32 %v1207, 1.0
    %v1336 = vadd.f32 %v1208, 1.0
    %v1337 = vadd.f32 %v1209, 1.0
    %v1338 = vadd.f32 %v1210, 1.0
    %v1339 = vadd.f32 %v1211, 1.0
    %v1340 = vadd.f32 %v1212, 1.0
    %v1341 = vadd.f32 %v1213, 1.0
    %v1342 = vadd.f32 %v1214, 1.0
    %v1343 = vadd.f32 %v1215, 1.0
    %v1344 = vadd.f32 %v1216, 1.0
    %v1345 = vadd.f32 %v1217, 1.0
    %v1346 = vadd.f32 %v1218, 1.0
    %v1347 = vadd.f32 %v1219, 1.0
    %v1348 = vadd.f32 %v1220, 1.0
    %v1349 = vadd.f32 %v1221, 1.0
    %v1350 = vadd.f32 %v1222, 1.0
    %v1351 = vadd.f32 %v1223, 1.0
    %v1352 = vadd.f32 %v1224, 1.0
    %v1353 = vadd.f32 %v1225, 1.0
    %v1354 = vadd.f32 %v1226, 1.0
    %v1355 = vadd.f32 %v1227, 1.0
    %v1356 = vadd.f32 %v1228, 1.0
    %v1357 = vadd.f32 %v1229, 1.0
    %v1358 = vadd.f32 %v1230, 1.0
    %v1359 = vadd.f32 %v1231, 1.0
    %v1360 = vadd.f32 %v1232, 1.0
    %v1361 = vadd.f32 %v1233, 1.0
    %v1362 = vadd.f32 %v1234, 1.0
    %v1363 = vadd.f32 %v1235, 1.0
    %v1364 = vadd.f32 %v1236, 1.0
    %v1365 = vadd.f32 %v1237, 1.0
    %v1366 = vadd.f32 %v1238, 1.0
    %v1367 = vadd.f32 %v1239, 1.0
    %v1368 = vadd.f32 %v1240, 1.0
    %v1369 = vadd.f32 %v1241, 1.0
    %v1370 = vadd.f32 %v1242, 1.0
    %v1371 = vadd.f32 %v1243, 1.0
    %v1372 = vadd.f32 %v1244, 1.0
    %v1373 = vadd.f32 %v1245, 1.0
    %v1374 = vadd.f32 %v1246, 1.0
    %v1375 = vadd.f32 %v1247, 1.0
    %v1376 = vadd.f32 %v1248, 1.0
    %v1377 = vadd.f32 %v1249, 1.0
    %v1378 = vadd.f32 %v1250, 1.0
    %v1379 = vadd.f32 %v1251, 1.0
    %v1380 = vadd.f32 %v1252, 1.0
    %v1381 = vadd.f32 %v1253, 1.0
    %v1382 = vadd.f32 %v1254, 1.0
    %v1383 = vadd.f32 %v1255, 1.0
    %v1384 = vadd.f32 %v1256, 1.0
    %v1385 = vadd.f32 %v1257, 1.0
    %v1386 = vadd.f32 %v1258, 1.0
    %v1387 = vadd.f32 %v1259, 1.0
    %v1388 = vadd.f32 %v1260, 1.0
    %v1389 = vadd.f32 %v1261, 1.0
    %v1390 = vadd.f32 %v1262, 1.0
    %v1391 = vadd.f32 %v1263, 1.0
    %v1392 = vadd.f32 %v1264, 1.0
    %v1393 = vadd.f32 %v1265, 1.0
    %v1394 = vadd.f32 %v1266, 1.0
    %v1395 = vadd.f32 %v1267, 1.0
    %v1396 = vadd.f32 %v1268, 1.0
    %v1397 = vmul.f32 %v1269, 0.5
    %v1398 = vmul.f32 %v1270, 0.5
    %v1399 = vmul.f32 %v1271, 0.5
    %v1400 = vmul.f32 %v1272, 0.5
    %v1401 = vmul.f32 %v1273, 0.5
    %v1402 = vmul.f32 %v1274, 0.5
    %v1403 = vmul.f32 %v1275, 0.5
    %v1404 = vmul.f32 %v1276, 0.5
    %v1405 = vmul.f32 %v1277, 0.5
    %v1406 = vmul.f32 %v1278, 0.5
    %v1407 = vmul.f32 %v1279, 0.5
    %v1408 = vmul.f32 %v1280, 0.5
    %v1409 = vmul.f32 %v1281, 0.5
    %v1410 = vmul.f32 %v1282, 0.5
    %v1411 = vmul.f32 %v1283, 0.5
    %v1412 = vmul.f32 %v1284, 0.5
    %v1413 = vmul.f32 %v1285, 0.5
    %v1414 = vmul.f32 %v1286, 0.5
    %v1415 = vmul.f32 %v1287, 0.5
    %v1416 = vmul.f32 %v1288, 0.5
    %v1417 = vmul.f32 %v1289, 0.5
    %v1418 = vmul.f32 %v1290, 0.5
    %v1419 = vmul.f32 %v1291, 0.5
    %v1420 = vmul.f32 %v1292, 0.5
    %v1421 = vmul.f32 %v1293, 0.5
    %v1422 = vmul.f32 %v1294, 0.5
    %v1423 = vmul.f32 %v1295, 0.5
    %v1424 = vmul.f32 %v1296, 0.5
    %v1425 = vmul.f32 %v1297, 0.5
    %v1426 = vmul.f32 %v1298, 0.5
    %v1427 = vmul.f32 %v1299, 0.5
    %v1428 = vmul.f32 %v1300, 0.5
    %v1429 = vmul.f32 %v1301, 0.5
    %v1430 = vmul.f32 %v1302, 0.5
    %v1431 = vmul.f32 %v1303, 0.5
    %v1432 = vmul.f32 %v1304, 0.5
    %v1433 = vmul.f32 %v1305, 0.5
    %v1434 = vmul.f32 %v1306, 0.5
    %v1435 = vmul.f32 %v1307, 0.5
    %v1436 = vmul.f32 %v1308, 0.5
    %v1437 = vmul.f32 %v1309, 0.5
    %v1438 = vmul.f32 %v1310, 0.5
    %v1439 = vmul.f32 %v1311, 0.5
    %v1440 = vmul.f32 %v1312, 0.5
    %v1441 = vmul.f32 %v1313, 0.5
    %v1442 = vmul.f32 %v1314, 0.5
    %v1443 = vmul.f32 %v1315, 0.5
    %v1444 = vmul.f32 %v1316, 0.5
    %v1445 = vmul.f32 %v1317, 0.5
    %v1446 = vmul.f32 %v1318, 0.5
    %v1447 = vmul.f32 %v1319, 0.5
    %v1448 = vmul.f32 %v1320, 0.5
    %v1449 = vmul.f32 %v1321, 0.5
    %v1450 = vmul.f32 %v1322, 0.5
    %v1451 = vmul.f32 %v1323, 0.5
    %v1452 = vmul.f32 %v1324, 0.5
    %v1453 = vmul.f32 %v1325, 0.5
    %v1454 = vmul.f32 %v1326, 0.5
    %v1455 = vmul.f32 %v1327, 0.5
    %v1456 = vmul.f32 %v1328, 0.5
    %v1457 = vmul.f32 %v1329, 0.5
    %v1458 = vmul.f32 %v1330, 0.5
    %v1459 = vmul.f32 %v1331, 0.5
    %v1460 = vmul.f32 %v1332, 0.5
    %v1461 = vmul.f32 %v1333, 0.5
    %v1462 = vmul.f32 %v1334, 0.5
    %v1463 = vmul.f32 %v1335, 0.5
    %v1464 = vmul.f32 %v1336, 0.5
    %v1465 = vmul.f32 %v1337, 0.5
    %v1466 = vmul.f32 %v1338, 0.5
    %v1467 = vmul.f32 %v1339, 0.5
    %v1468 = vmul.f32 %v1340, 0.5
    %v1469 = vmul.f32 %v1341, 0.5
    %v1470 = vmul.f32 %v1342, 0.5
    %v1471 = vmul.f32 %v1343, 0.5
    %v1472 = vmul.f32 %v1344, 0.5
    %v1473 = vmul.f32 %v1345, 0.5
    %v1474 = vmul.f32 %v1346, 0.5
    %v1475 = vmul.f32 %v1347, 0.5
    %v1476 = vmul.f32 %v1348, 0.5
    %v1477 = vmul.f32 %v1349, 0.5
    %v1478 = vmul.f32 %v1350, 0.5
    %v1479 = vmul.f32 %v1351, 0.5
    %v1480 = vmul.f32 %v1352, 0.5
    %v1481 = vmul.f32 %v1353, 0.5
    %v1482 = vmul.f32 %v1354, 0.5
    %v1483 = vmul.f32 %v1355, 0.5
    %v1484 = vmul.f32 %v1356, 0.5
    %v1485 = vmul.f32 %v1357, 0.5
    %v1486 = vmul.f32 %v1358, 0.5
    %v1487 = vmul.f32 %v1359, 0.5
    %v1488 = vmul.f32 %v1360, 0.5
    %v1489 = vmul.f32 %v1361, 0.5
    %v1490 = vmul.f32 %v1362, 0.5
    %v1491 = vmul.f32 %v1363, 0.5
    %v1492 = vmul.f32 %v1364, 0.5
    %v1493 = vmul.f32 %v1365, 0.5
    %v1494 = vmul.f32 %v1366, 0.5
    %v1495 = vmul.f32 %v1367, 0.5
    %v1496 = vmul.f32 %v1368, 0.5
    %v1497 = vmul.f32 %v1369, 0.5
    %v1498 = vmul.f32 %v1370, 0.5
    %v1499 = vmul.f32 %v1371, 0.5
    %v1500 = vmul.f32 %v1372, 0.5
    %v1501 = vmul.f32 %v1373, 0.5
    %v1502 = vmul.f32 %v1374, 0.5
    %v1503 = vmul.f32 %v1375, 0.5
    %v1504 = vmul.f32 %v1376, 0.5
    %v1505 = vmul.f32 %v1377, 0.5
    %v1506 = vmul.f32 %v1378, 0.5
    %v1507 = vmul.f32 %v1379, 0.5
    %v1508 = vmul.f32 %v1380, 0.5
    %v1509 = vmul.f32 %v1381, 0.5
    %v1510 = vmul.f32 %v1382, 0.5
    %v1511 = vmul.f32 %v1383, 0.5
    %v1512 = vmul.f32 %v1384, 0.5
    %v1513 = vmul.f32 %v1385, 0.5
    %v1514 = vmul.f32 %v1386, 0.5
    %v1515 = vmul.f32 %v1387, 0.5
    %v1516 = vmul.f32 %v1388, 0.5
    %v1517 = vmul.f32 %v1389, 0.5
    %v1518 = vmul.f32 %v1390, 0.5
    %v1519 = vmul.f32 %v1391, 0.5
    %v1520 = vmul.f32 %v1392, 0.5
    %v1521 = vmul.f32 %v1393, 0.5
    %v1522 = vmul.f32 %v1394, 0.5
    %v1523 = vmul.f32 %v1395, 0.5
    %v1524 = vmul.f32 %v1396, 0.5
    %1525 = vst [vmem:[#allocation2] sm:$0xff] %v1397
    %1526 = vst [vmem:[#allocation2 + $0x8] sm:$0xff] %v1398
    %1527 = vst [vmem:[#allocation2 + $0x10] sm:$0xff] %v1399
    %1528 = vst [vmem:[#allocation2 + $0x18] sm:$0xff] %v1400
    %1529 = vst [vmem:[#allocation2 + $0x20] sm:$0xff] %v1401
    %1530 = vst [vmem:[#allocation2 + $0x28] sm:$0xff] %v1402
    %1531 = vst [vmem:[#allocation2 + $0x30] sm:$0xff] %v1403
    %1532 = vst [vmem:[#allocation2 + $0x38] sm:$0xff] %v1404
    %1533 = vst [vmem:[#allocation2 + $0x40] sm:$0xff] %v1405
    %1534 = vst [vmem:[#allocation2 + $0x48] sm:$0xff] %v1406
    %1535 = vst [vmem:[#allocation2 + $0x50] sm:$0xff] %v1407
    %1536 = vst [vmem:[#allocation2 + $0x58] sm:$0xff] %v1408
    %1537 = vst [vmem:[#allocation2 + $0x60] sm:$0xff] %v1409
    %1538 = vst [vmem:[#allocation2 + $0x68] sm:$0xff] %v1410
    %1539 = vst [vmem:[#allocation2 + $0x70] sm:$0xff] %v1411
    %1540 = vst [vmem:[#allocation2 + $0x78] sm:$0xff] %v1412
    %1541 = vst [vmem:[#allocation2 + $0x80] sm:$0xff] %v1413
    %1542 = vst [vmem:[#allocation2 + $0x88] sm:$0xff] %v1414
    %1543 = vst [vmem:[#allocation2 + $0x90] sm:$0xff] %v1415
    %1544 = vst [vmem:[#allocation2 + $0x98] sm:$0xff] %v1416
    %1545 = vst [vmem:[#allocation2 + $0xa0] sm:$0xff] %v1417
    %1546 = vst [vmem:[#allocation2 + $0xa8] sm:$0xff] %v1418
    %1547 = vst [vmem:[#allocation2 + $0xb0] sm:$0xff] %v1419
    %1548 = vst [vmem:[#allocation2 + $0xb8] sm:$0xff] %v1420
    %1549 = vst [vmem:[#allocation2 + $0xc0] sm:$0xff] %v1421
    %1550 = vst [vmem:[#allocation2 + $0xc8] sm:$0xff] %v1422
    %1551 = vst [vmem:[#allocation2 + $0xd0] sm:$0xff] %v1423
    %1552 = vst [vmem:[#allocation2 + $0xd8] sm:$0xff] %v1424
    %1553 = vst [vmem:[#allocation2 + $0xe0] sm:$0xff] %v1425
    %1554 = vst [vmem:[#allocation2 + $0xe8] sm:$0xff] %v1426
    %1555 = vst [vmem:[#allocation2 + $0xf0] sm:$0xff] %v1427
    %1556 = vst [vmem:[#allocation2 + $0xf8] sm:$0xff] %v1428
    %1557 = vst [vmem:[#allocation2 + $0x100] sm:$0xff] %v1429
    %1558 = vst [vmem:[#allocation2 + $0x108] sm:$0xff] %v1430
    %1559 = vst [vmem:[#allocation2 + $0x110] sm:$0xff] %v1431
    %1560 = vst [vmem:[#allocation2 + $0x118] sm:$0xff] %v1432
    %1561 = vst [vmem:[#allocation2 + $0x120] sm:$0xff] %v1433
    %1562 = vst [vmem:[#allocation2 + $0x128] sm:$0xff] %v1434
    %1563 = vst [vmem:[#allocation2 + $0x130] sm:$0xff] %v1435
    %1564 = vst [vmem:[#allocation2 + $0x138] sm:$0xff] %v1436
    %1565 = vst [vmem:[#allocation2 + $0x140] sm:$0xff] %v1437
    %1566 = vst [vmem:[#allocation2 + $0x148] sm:$0xff] %v1438
    %1567 = vst [vmem:[#allocation2 + $0x150] sm:$0xff] %v1439
    %1568 = vst [vmem:[#allocation2 + $0x158] sm:$0xff] %v1440
    %1569 = vst [vmem:[#allocation2 + $0x160] sm:$0xff] %v1441
    %1570 = vst [vmem:[#allocation2 + $0x168] sm:$0xff] %v1442
    %1571 = vst [vmem:[#allocation2 + $0x170] sm:$0xff] %v1443
    %1572 = vst [vmem:[#allocation2 + $0x178] sm:$0xff] %v1444
    %1573 = vst [vmem:[#allocation2 + $0x180] sm:$0xff] %v1445
    %1574 = vst [vmem:[#allocation2 + $0x188] sm:$0xff] %v1446
    %1575 = vst [vmem:[#allocation2 + $0x190] sm:$0xff] %v1447
    %1576 = vst [vmem:[#allocation2 + $0x198] sm:$0xff] %v1448
    %1577 = vst [vmem:[#allocation2 + $0x1a0] sm:$0xff] %v1449
    %1578 = vst [vmem:[#allocation2 + $0x1a8] sm:$0xff] %v1450
    %1579 = vst [vmem:[#allocation2 + $0x1b0] sm:$0xff] %v1451
    %1580 = vst [vmem:[#allocation2 + $0x1b8] sm:$0xff] %v1452
    %1581 = vst [vmem:[#allocation2 + $0x1c0] sm:$0xff] %v1453
    %1582 = vst [vmem:[#allocation2 + $0x1c8] sm:$0xff] %v1454
    %1583 = vst [vmem:[#allocation2 + $0x1d0] sm:$0xff] %v1455
    %1584 = vst [vmem:[#allocation2 + $0x1d8] sm:$0xff] %v1456
    %1585 = vst [vmem:[#allocation2 + $0x1e0] sm:$0xff] %v1457
    %1586 = vst [vmem:[#allocation2 + $0x1e8] sm:$0xff] %v1458
    %1587 = vst [vmem:[#allocation2 + $0x1f0] sm:$0xff] %v1459
    %1588 = vst [vmem:[#allocation2 + $0x1f8] sm:$0xff] %v1460
    %1589 = vst [vmem:[#allocation2 + $0x200] sm:$0xff] %v1461
    %1590 = vst [vmem:[#allocation2 + $0x208] sm:$0xff] %v1462
    %1591 = vst [vmem:[#allocation2 + $0x210] sm:$0xff] %v1463
    %1592 = vst [vmem:[#allocation2 + $0x218] sm:$0xff] %v1464
    %1593 = vst [vmem:[#allocation2 + $0x220] sm:$0xff] %v1465
    %1594 = vst [vmem:[#allocation2 + $0x228] sm:$0xff] %v1466
    %1595 = vst [vmem:[#allocation2 + $0x230] sm:$0xff] %v1467
    %1596 = vst [vmem:[#allocation2 + $0x238] sm:$0xff] %v1468
    %1597 = vst [vmem:[#allocation2 + $0x240] sm:$0xff] %v1469
    %1598 = vst [vmem:[#allocation2 + $0x248] sm:$0xff] %v1470
    %1599 = vst [vmem:[#allocation2 + $0x250] sm:$0xff] %v1471
    %1600 = vst [vmem:[#allocation2 + $0x258] sm:$0xff] %v1472
    %1601 = vst [vmem:[#allocation2 + $0x260] sm:$0xff] %v1473
    %1602 = vst [vmem:[#allocation2 + $0x268] sm:$0xff] %v1474
    %1603 = vst [vmem:[#allocation2 + $0x270] sm:$0xff] %v1475
    %1604 = vst [vmem:[#allocation2 + $0x278] sm:$0xff] %v1476
    %1605 = vst [vmem:[#allocation2 + $0x280] sm:$0xff] %v1477
    %1606 = vst [vmem:[#allocation2 + $0x288] sm:$0xff] %v1478
    %1607 = vst [vmem:[#allocation2 + $0x290] sm:$0xff] %v1479
    %1608 = vst [vmem:[#allocation2 + $0x298] sm:$0xff] %v1480
    %1609 = vst [vmem:[#allocation2 + $0x2a0] sm:$0xff] %v1481
    %1610 = vst [vmem:[#allocation2 + $0x2a8] sm:$0xff] %v1482
    %1611 = vst [vmem:[#allocation2 + $0x2b0] sm:$0xff] %v1483
    %1612 = vst [vmem:[#allocation2 + $0x2b8] sm:$0xff] %v1484
    %1613 = vst [vmem:[#allocation2 + $0x2c0] sm:$0xff] %v1485
    %1614 = vst [vmem:[#allocation2 + $0x2c8] sm:$0xff] %v1486
    %1615 = vst [vmem:[#allocation2 + $0x2d0] sm:$0xff] %v1487
    %1616 = vst [vmem:[#allocation2 + $0x2d8] sm:$0xff] %v1488
    %1617 = vst [vmem:[#allocation2 + $0x2e0] sm:$0xff] %v1489
    %1618 = vst [vmem:[#allocation2 + $0x2e8] sm:$0xff] %v1490
    %1619 = vst [vmem:[#allocation2 + $0x2f0] sm:$0xff] %v1491
    %1620 = vst [vmem:[#allocation2 + $0x2f8] sm:$0xff] %v1492
    %1621 = vst [vmem:[#allocation2 + $0x300] sm:$0xff] %v1493
    %1622 = vst [vmem:[#allocation2 + $0x308] sm:$0xff] %v1494
    %1623 = vst [vmem:[#allocation2 + $0x310] sm:$0xff] %v1495
    %1624 = vst [vmem:[#allocation2 + $0x318] sm:$0xff] %v1496
    %1625 = vst [vmem:[#allocation2 + $0x320] sm:$0xff] %v1497
    %1626 = vst [vmem:[#allocation2 + $0x328] sm:$0xff] %v1498
    %1627 = vst [vmem:[#allocation2 + $0x330] sm:$0xff] %v1499
    %1628 = vst [vmem:[#allocation2 + $0x338] sm:$0xff] %v1500
    %1629 = vst [vmem:[#allocation2 + $0x340] sm:$0xff] %v1501
    %1630 = vst [vmem:[#allocation2 + $0x348] sm:$0xff] %v1502
    %1631 = vst [vmem:[#allocation2 + $0x350] sm:$0xff] %v1503
    %1632 = vst [vmem:[#allocation2 + $0x358] sm:$0xff] %v1504
    %1633 = vst [vmem:[#allocation2 + $0x360] sm:$0xff] %v1505
    %1634 = vst [vmem:[#allocation2 + $0x368] sm:$0xff] %v1506
    %1635 = vst [vmem:[#allocation2 + $0x370] sm:$0xff] %v1507
    %1636 = vst [vmem:[#allocation2 + $0x378] sm:$0xff] %v1508
    %1637 = vst [vmem:[#allocation2 + $0x380] sm:$0xff] %v1509
    %1638 = vst [vmem:[#allocation2 + $0x388] sm:$0xff] %v1510
    %1639 = vst [vmem:[#allocation2 + $0x390] sm:$0xff] %v1511
    %1640 = vst [vmem:[#allocation2 + $0x398] sm:$0xff] %v1512
    %1641 = vst [vmem:[#allocation2 + $0x3a0] sm:$0xff] %v1513
    %1642 = vst [vmem:[#allocation2 + $0x3a8] sm:$0xff] %v1514
    %1643 = vst [vmem:[#allocation2 + $0x3b0] sm:$0xff] %v1515
    %1644 = vst [vmem:[#allocation2 + $0x3b8] sm:$0xff] %v1516
    %1645 = vst [vmem:[#allocation2 + $0x3c0] sm:$0xff] %v1517
    %1646 = vst [vmem:[#allocation2 + $0x3c8] sm:$0xff] %v1518
    %1647 = vst [vmem:[#allocation2 + $0x3d0] sm:$0xff] %v1519
    %1648 = vst [vmem:[#allocation2 + $0x3d8] sm:$0xff] %v1520
    %1649 = vst [vmem:[#allocation2 + $0x3e0] sm:$0xff] %v1521
    %1650 = vst [vmem:[#allocation2 + $0x3e8] sm:$0xff] %v1522
    %1651 = vst [vmem:[#allocation2 + $0x3f0] sm:$0xff] %v1523
    %1652 = vst [vmem:[#allocation2 + $0x3f8] sm:$0xff] %v1524
    // Predicated region
    $region22: #{decoder_forward.1} parent=1 // pred_check
      _
    $region23: #{decoder_forward.1} parent=1 // pred_check_branch
      %1654 = sbr.rel (0) target = $region25
    $region24: #{decoder_forward.1} parent=1 // pred_region
      %1656 = vsyncadd [#allocation3], 0
      %s1657 = sshll.u32 [#allocation2], 4
      %s1658 = int_to_ptr.vmem [resolvable:$true] %s1657
      %s1659 = sshll.u32 %s5, 4
      %s1660 = int_to_ptr.hbm [resolvable:$true] %s1659
      %1665 = dma.vmem_to_hbm [thread:$0]  %s1658, 16384, %s1660, [#allocation3], 256, 256, 16
    $region25: #{decoder_forward.1} parent=1 // pred_fallthru
      _
    // Predicated region
    $region26: #{decoder_forward.1} parent=1 // pred_check
      _
    $region27: #{decoder_forward.1} parent=1 // pred_check_branch
      %1667 = sbr.rel (0) target = $region29
    $region28: #{decoder_forward.1} parent=1 // pred_region
      %1669 = dma.done [#allocation3], 16384
    $region29: #{decoder_forward.1} parent=1 // pred_fallthru
      _
    %1670 = vsyncpa [#allocation3], 1

</llo_original>
